<compile_context>
chip_gen: v7x
topology: tpu7x:2x2x1
jax: 0.10.0
libtpu: 0.0.40
codegen_flags: <defaults>
</compile_context>

<pallas_src>
import functools

import jax
import jax.numpy as jnp
from jax.experimental import pallas as pl
from jax.experimental.pallas import tpu as pltpu


# ----------------------------------------------------------------------------
# Fused bidirectional LSTM recurrence (fully unrolled, value-resident state)
# ----------------------------------------------------------------------------
def _bilstm_unrolled(proj, w_hh, *, T, B, H):
    """Run a fused bidirectional LSTM over T steps.

    proj: (T*B, 8H) value.  Row block s holds the input-gate projections of
          x[s] for the forward direction and of x[T-1-s] for the backward
          direction, with gate columns interleaved as
          [i_f i_b | f_f f_b | g_f g_b | o_f o_b] (each block H wide).
    w_hh: (2H, 8H) recurrent weights: rows [0,H) map the forward hidden state
          to the forward gate columns, rows [H,2H) map the backward hidden
          state to the backward gate columns.
    Returns (hs_f, hs_b, h_last): hs_f[t] / hs_b[t] are (B, H) hidden states
    at *original* time t; h_last is (B, 2H) = [fwd final | bwd final].
    """
    H2 = 2 * H
    h = jnp.zeros((B, H2), jnp.float32)
    c = jnp.zeros((B, H2), jnp.float32)
    hs_f = [None] * T
    hs_b = [None] * T

    for s in range(T):
        g = proj[s * B:(s + 1) * B, :]
        if s > 0:
            g = g + jnp.dot(h, w_hh, preferred_element_type=jnp.float32)
        i = jax.nn.sigmoid(g[:, 0 * H2:1 * H2])
        f = jax.nn.sigmoid(g[:, 1 * H2:2 * H2])
        gg = jnp.tanh(g[:, 2 * H2:3 * H2])
        o = jax.nn.sigmoid(g[:, 3 * H2:4 * H2])
        c = f * c + i * gg
        h = o * jnp.tanh(c)
        hs_f[s] = h[:, 0:H]            # fwd hidden at original time s
        hs_b[T - 1 - s] = h[:, H:H2]   # bwd hidden at original time T-1-s

    return hs_f, hs_b, h               # h == [fwd final | bwd final]


# ----------------------------------------------------------------------------
# Whole-model Pallas kernel
# ----------------------------------------------------------------------------
def rnn_fused_kernel(T, B, H, V,
                     ids_f_ref, ids_b_ref,
                     tab1f_ref, tab1b_ref, w_hh1_ref, b1_ref,
                     w_ih2_ref, w_hh2_ref, b2_ref,
                     w_fc_ref, b_fc_ref, out_ref):
    """Full RNNModel body: embedding + 2 bi-LSTM layers + FC + sigmoid.

    ids_f:  (T*B, 1) int32  token ids, time-major (t*B + b)
    ids_b:  (T*B, 1) int32  token ids, time-reversed (row t*B+b holds t=T-1-t)
    tab1f/tab1b: (V, 8H)    embedding @ W_ih1 folded tables (fwd / bwd cols)
    w_hh*:  (2H, 8H)        packed recurrent weights (interleaved gate cols)
    b*:     (1, 8H)         combined (b_ih + b_hh) biases, both directions
    w_ih2:  (4H, 8H)        rows [0,2H) -> fwd gates from y1(t),
                            rows [2H,4H) -> bwd gates from y1(T-1-t)
    w_fc:   (2H, 1), b_fc: (1, 1)
    out_ref: (B, 1)         sigmoid(FC([h2_fwd_final, h2_bwd_final]))
    """
    TB = T * B

    # ---- embedding lookup fused as one-hot matmuls against pre-folded tables
    iota_v = jax.lax.broadcasted_iota(jnp.int32, (TB, V), 1)
    oh_f = (ids_f_ref[...] == iota_v).astype(jnp.float32)       # (TB, V)
    oh_b = (ids_b_ref[...] == iota_v).astype(jnp.float32)       # (TB, V)
    proj1 = (jnp.dot(oh_f, tab1f_ref[...], preferred_element_type=jnp.float32)
             + jnp.dot(oh_b, tab1b_ref[...], preferred_element_type=jnp.float32)
             + b1_ref[...])                                      # (TB, 8H)

    hs1_f, hs1_b, _ = _bilstm_unrolled(proj1, w_hh1_ref[...], T=T, B=B, H=H)

    # ---- layer 2 input: row t = [y1(t) | y1(T-1-t)]; projections for all
    #      timesteps hoisted into one lane-dense matmul (256 output lanes).
    z2 = jnp.concatenate(
        [jnp.concatenate([hs1_f[t], hs1_b[t],
                          hs1_f[T - 1 - t], hs1_b[T - 1 - t]], axis=-1)
         for t in range(T)], axis=0)                             # (TB, 4H)
    proj2 = (jnp.dot(z2, w_ih2_ref[...], preferred_element_type=jnp.float32)
             + b2_ref[...])                                      # (TB, 8H)

    _, _, h_last = _bilstm_unrolled(proj2, w_hh2_ref[...], T=T, B=B, H=H)

    # ---- fused FC + sigmoid epilogue (h_last == [fwd final | bwd final])
    # TODO(synk): nn.Dropout before the FC is identity at inference;
    # training-mode random masking is not implemented here.
    logits = (jnp.dot(h_last, w_fc_ref[...], preferred_element_type=jnp.float32)
              + b_fc_ref[...])
    out_ref[...] = jax.nn.sigmoid(logits)


# ----------------------------------------------------------------------------
# Wrapper
# ----------------------------------------------------------------------------
_VMEM = pl.BlockSpec(memory_space=pltpu.MemorySpace.VMEM)


def rnn_model_forward(packed, x_ids):
    """Forward pass equivalent to RNNModel.forward (inference).

    x_ids: (batch, seq) int32 token ids -> (batch,) f32 sigmoid outputs.
    """
    B, T = x_ids.shape
    H = packed["w_hh1"].shape[0] // 2
    V = packed["tab1_f"].shape[0]

    ids_tm = x_ids.astype(jnp.int32).T                   # (T, B) time-major
    ids_f = ids_tm.reshape(T * B, 1)
    ids_b = ids_tm[::-1].reshape(T * B, 1)               # time-reversed order

    kernel = functools.partial(rnn_fused_kernel, T, B, H, V)
    out = pl.pallas_call(
        kernel,
        out_shape=jax.ShapeDtypeStruct((B, 1), jnp.float32),
        in_specs=[_VMEM] * 11,
        out_specs=_VMEM,
    )(ids_f, ids_b,
      packed["tab1_f"], packed["tab1_b"], packed["w_hh1"], packed["b1"],
      packed["w_ih2"], packed["w_hh2"], packed["b2"],
      packed["fc_w_T"], packed["fc_b"])
    return jnp.squeeze(out, axis=-1)                     # (B,)


# ----------------------------------------------------------------------------
# Parameters: PyTorch-layout "raw" params + packing into the kernel layout
# ----------------------------------------------------------------------------
def make_raw_params(key, vocab, emb_dim, hidden):
    """PyTorch-equivalent random init (per-direction LSTM weights, fc)."""
    H = hidden

    def lstm_dir(kk, in_dim):
        k1, k2, k3, k4 = jax.random.split(kk, 4)
        s = 1.0 / jnp.sqrt(H)
        return dict(
            w_ih=jax.random.uniform(k1, (4 * H, in_dim), jnp.float32, -s, s),
            w_hh=jax.random.uniform(k2, (4 * H, H), jnp.float32, -s, s),
            b_ih=jax.random.uniform(k3, (4 * H,), jnp.float32, -s, s),
            b_hh=jax.random.uniform(k4, (4 * H,), jnp.float32, -s, s))

    keys = jax.random.split(key, 7)
    embedding = jax.random.normal(keys[0], (vocab, emb_dim), jnp.float32)
    raw = dict(
        embedding=embedding,
        l1f=lstm_dir(keys[1], emb_dim), l1b=lstm_dir(keys[2], emb_dim),
        l2f=lstm_dir(keys[3], 2 * H),   l2b=lstm_dir(keys[4], 2 * H))
    fs = 1.0 / jnp.sqrt(2.0 * H)
    raw["fc_w"] = jax.random.uniform(keys[5], (1, 2 * H), jnp.float32, -fs, fs)
    raw["fc_b"] = jax.random.uniform(keys[6], (1,), jnp.float32, -fs, fs)
    return raw


def pack_params(raw):
    """Repack PyTorch-layout weights into the fused-kernel layout.

    Gate columns are interleaved per direction:
    [i_f i_b | f_f f_b | g_f g_b | o_f o_b], each block H wide.  The layer-1
    input weights are pre-multiplied by the embedding table (inference-time
    constant fold), so the kernel only consumes token ids.
    """
    H = raw["l1f"]["w_hh"].shape[1]

    def scatter_cols(w_t, d):          # w_t: (rows, 4H) gate blocks i,f,g,o
        out = jnp.zeros((w_t.shape[0], 8 * H), jnp.float32)
        for g in range(4):
            out = out.at[:, (2 * g + d) * H:(2 * g + d + 1) * H].set(
                w_t[:, g * H:(g + 1) * H])
        return out

    def pack_bias(p, d):
        return scatter_cols((p["b_ih"] + p["b_hh"]).reshape(1, -1), d)

    emb = raw["embedding"]
    packed = dict(
        # layer 1: embedding folded into the input-projection tables
        tab1_f=scatter_cols(emb @ raw["l1f"]["w_ih"].T, 0),      # (V, 8H)
        tab1_b=scatter_cols(emb @ raw["l1b"]["w_ih"].T, 1),      # (V, 8H)
        w_hh1=jnp.concatenate([scatter_cols(raw["l1f"]["w_hh"].T, 0),
                               scatter_cols(raw["l1b"]["w_hh"].T, 1)], axis=0),
        b1=pack_bias(raw["l1f"], 0) + pack_bias(raw["l1b"], 1),
        # layer 2
        w_ih2=jnp.concatenate([scatter_cols(raw["l2f"]["w_ih"].T, 0),
                               scatter_cols(raw["l2b"]["w_ih"].T, 1)], axis=0),
        w_hh2=jnp.concatenate([scatter_cols(raw["l2f"]["w_hh"].T, 0),
                               scatter_cols(raw["l2b"]["w_hh"].T, 1)], axis=0),
        b2=pack_bias(raw["l2f"], 0) + pack_bias(raw["l2b"], 1),
        # fc
        fc_w_T=raw["fc_w"].T,                                    # (2H, 1)
        fc_b=raw["fc_b"].reshape(1, 1))
    return packed


# ----------------------------------------------------------------------------
# Pure-JAX reference (PyTorch-faithful), for correctness checking
# ----------------------------------------------------------------------------
def rnn_model_reference(raw, x_ids):
    emb = raw["embedding"][x_ids]                     # (B, T, E)
    x = jnp.transpose(emb, (1, 0, 2))                 # (T, B, E)

    def run_dir(seq, p, reverse):
        T_, B_, _ = seq.shape
        Hd = p["w_hh"].shape[1]
        xs = seq[::-1] if reverse else seq
        h = jnp.zeros((B_, Hd), jnp.float32)
        c = jnp.zeros((B_, Hd), jnp.float32)
        outs = []
        for t in range(T_):
            g = xs[t] @ p["w_ih"].T + p["b_ih"] + h @ p["w_hh"].T + p["b_hh"]
            i = jax.nn.sigmoid(g[:, 0:Hd])
            f = jax.nn.sigmoid(g[:, Hd:2 * Hd])
            gg = jnp.tanh(g[:, 2 * Hd:3 * Hd])
            o = jax.nn.sigmoid(g[:, 3 * Hd:4 * Hd])
            c = f * c + i * gg
            h = o * jnp.tanh(c)
            outs.append(h)
        outs = jnp.stack(outs, axis=0)
        if reverse:
            outs = outs[::-1]
        return outs, h

    o1f, _ = run_dir(x, raw["l1f"], False)
    o1b, _ = run_dir(x, raw["l1b"], True)
    y1 = jnp.concatenate([o1f, o1b], axis=-1)          # (T, B, 2H)
    _, h2f = run_dir(y1, raw["l2f"], False)
    _, h2b = run_dir(y1, raw["l2b"], True)
    hcat = jnp.concatenate([h2f, h2b], axis=-1)        # (B, 2H)
    lv = hcat @ raw["fc_w"].T + raw["fc_b"]
    return jax.nn.sigmoid(lv).squeeze(-1)


# ----------------------------------------------------------------------------
# Main
# ----------------------------------------------------------------------------
if __name__ == "__main__":
    # Small shapes consistent with the module's forward:
    batch = 2
    seq_length = 8
    nuc_pair_size = 4          # module does nuc_pair_size += 1 -> vocab = 5
    vocab = nuc_pair_size + 1
    embedding_dims = 16
    e_hidden_dims = 32

    key = jax.random.PRNGKey(0)
    k_par, k_ids = jax.random.split(key)

    raw = make_raw_params(k_par, vocab, embedding_dims, e_hidden_dims)
    packed = pack_params(raw)
    x_ids = jax.random.randint(k_ids, (batch, seq_length), 0, vocab,
                               dtype=jnp.int32)

    fwd = jax.jit(rnn_model_forward)
    out = jax.block_until_ready(fwd(packed, x_ids))
    ref = jax.block_until_ready(jax.jit(rnn_model_reference)(raw, x_ids))

    assert out.shape == (batch,), out.shape
    assert bool(jnp.all(jnp.isfinite(out)))
    assert bool(jnp.allclose(out, ref, rtol=5e-4, atol=5e-4)), (out, ref)
    print("KERNEL_OK")
</pallas_src>

<mosaic_0001>
module attributes {stable_mosaic.version = 11 : i64} {
  func.func @rnn_fused_kernel(%arg0: memref<16x1xi32, #tpu.memory_space<vmem>>, %arg1: memref<16x1xi32, #tpu.memory_space<vmem>>, %arg2: memref<5x256xf32, #tpu.memory_space<vmem>>, %arg3: memref<5x256xf32, #tpu.memory_space<vmem>>, %arg4: memref<64x256xf32, #tpu.memory_space<vmem>>, %arg5: memref<1x256xf32, #tpu.memory_space<vmem>>, %arg6: memref<128x256xf32, #tpu.memory_space<vmem>>, %arg7: memref<64x256xf32, #tpu.memory_space<vmem>>, %arg8: memref<1x256xf32, #tpu.memory_space<vmem>>, %arg9: memref<64x1xf32, #tpu.memory_space<vmem>>, %arg10: memref<1x1xf32, #tpu.memory_space<vmem>>, %arg11: memref<2x1xf32, #tpu.memory_space<vmem>>) attributes {dimension_semantics = [], scalar_prefetch = 0 : i64, scratch_operands = 0 : i64, tpu.core_type = #tpu.core_type<tc>} {
    %0 = tpu.iota {dimensions = array<i32: 1>} : vector<16x5xi32>
    %c0 = arith.constant 0 : index
    %c0_0 = arith.constant 0 : index
    %1 = vector.load %arg0[%c0, %c0_0] : memref<16x1xi32, #tpu.memory_space<vmem>>, vector<16x1xi32>
    %2 = vector.broadcast %1 : vector<16x1xi32> to vector<16x5xi32>
    %3 = arith.cmpi eq, %2, %0 : vector<16x5xi32>
    %4 = arith.extui %3 : vector<16x5xi1> to vector<16x5xi32>
    %5 = arith.sitofp %4 : vector<16x5xi32> to vector<16x5xf32>
    %c0_1 = arith.constant 0 : index
    %c0_2 = arith.constant 0 : index
    %6 = vector.load %arg1[%c0_1, %c0_2] : memref<16x1xi32, #tpu.memory_space<vmem>>, vector<16x1xi32>
    %7 = vector.broadcast %6 : vector<16x1xi32> to vector<16x5xi32>
    %8 = arith.cmpi eq, %7, %0 : vector<16x5xi32>
    %9 = arith.extui %8 : vector<16x5xi1> to vector<16x5xi32>
    %10 = arith.sitofp %9 : vector<16x5xi32> to vector<16x5xf32>
    %c0_3 = arith.constant 0 : index
    %c0_4 = arith.constant 0 : index
    %11 = vector.load %arg2[%c0_3, %c0_4] : memref<5x256xf32, #tpu.memory_space<vmem>>, vector<5x256xf32>
    %cst = arith.constant dense<0.000000e+00> : vector<16x256xf32>
    %12 = tpu.matmul %5, %11, %cst {dimension_numbers = #tpu.dot_dimension_numbers<[1], [0], [0], [1], [0, 0, 1, 1], [], []>} : vector<16x5xf32>, vector<5x256xf32>, vector<16x256xf32> -> vector<16x256xf32>
    %c0_5 = arith.constant 0 : index
    %c0_6 = arith.constant 0 : index
    %13 = vector.load %arg3[%c0_5, %c0_6] : memref<5x256xf32, #tpu.memory_space<vmem>>, vector<5x256xf32>
    %cst_7 = arith.constant dense<0.000000e+00> : vector<16x256xf32>
    %14 = tpu.matmul %10, %13, %cst_7 {dimension_numbers = #tpu.dot_dimension_numbers<[1], [0], [0], [1], [0, 0, 1, 1], [], []>} : vector<16x5xf32>, vector<5x256xf32>, vector<16x256xf32> -> vector<16x256xf32>
    %15 = arith.addf %12, %14 : vector<16x256xf32>
    %c0_8 = arith.constant 0 : index
    %c0_9 = arith.constant 0 : index
    %16 = vector.load %arg5[%c0_8, %c0_9] : memref<1x256xf32, #tpu.memory_space<vmem>>, vector<1x256xf32>
    %17 = vector.broadcast %16 : vector<1x256xf32> to vector<16x256xf32>
    %18 = arith.addf %15, %17 : vector<16x256xf32>
    %c0_10 = arith.constant 0 : index
    %c0_11 = arith.constant 0 : index
    %19 = vector.load %arg4[%c0_10, %c0_11] : memref<64x256xf32, #tpu.memory_space<vmem>>, vector<64x256xf32>
    %cst_12 = arith.constant 0.000000e+00 : f32
    %20 = vector.broadcast %cst_12 : f32 to vector<2x64xf32>
    %21 = vector.extract_strided_slice %18 {offsets = [0, 0], sizes = [2, 256], strides = [1, 1]} : vector<16x256xf32> to vector<2x256xf32>
    %22 = vector.extract_strided_slice %21 {offsets = [0, 0], sizes = [2, 64], strides = [1, 1]} : vector<2x256xf32> to vector<2x64xf32>
    %23 = arith.negf %22 : vector<2x64xf32>
    %24 = math.exp %23 : vector<2x64xf32>
    %cst_13 = arith.constant 1.000000e+00 : f32
    %25 = vector.broadcast %cst_13 : f32 to vector<2x64xf32>
    %26 = arith.addf %25, %24 : vector<2x64xf32>
    %27 = arith.divf %25, %26 : vector<2x64xf32>
    %28 = vector.extract_strided_slice %21 {offsets = [0, 64], sizes = [2, 64], strides = [1, 1]} : vector<2x256xf32> to vector<2x64xf32>
    %29 = arith.negf %28 : vector<2x64xf32>
    %30 = math.exp %29 : vector<2x64xf32>
    %cst_14 = arith.constant 1.000000e+00 : f32
    %31 = vector.broadcast %cst_14 : f32 to vector<2x64xf32>
    %32 = arith.addf %31, %30 : vector<2x64xf32>
    %33 = arith.divf %31, %32 : vector<2x64xf32>
    %34 = vector.extract_strided_slice %21 {offsets = [0, 128], sizes = [2, 64], strides = [1, 1]} : vector<2x256xf32> to vector<2x64xf32>
    %35 = math.tanh %34 : vector<2x64xf32>
    %36 = vector.extract_strided_slice %21 {offsets = [0, 192], sizes = [2, 64], strides = [1, 1]} : vector<2x256xf32> to vector<2x64xf32>
    %37 = arith.negf %36 : vector<2x64xf32>
    %38 = math.exp %37 : vector<2x64xf32>
    %cst_15 = arith.constant 1.000000e+00 : f32
    %39 = vector.broadcast %cst_15 : f32 to vector<2x64xf32>
    %40 = arith.addf %39, %38 : vector<2x64xf32>
    %41 = arith.divf %39, %40 : vector<2x64xf32>
    %42 = arith.mulf %33, %20 : vector<2x64xf32>
    %43 = arith.mulf %27, %35 : vector<2x64xf32>
    %44 = arith.addf %42, %43 : vector<2x64xf32>
    %45 = math.tanh %44 : vector<2x64xf32>
    %46 = arith.mulf %41, %45 : vector<2x64xf32>
    %47 = vector.extract_strided_slice %46 {offsets = [0, 0], sizes = [2, 32], strides = [1, 1]} : vector<2x64xf32> to vector<2x32xf32>
    %48 = vector.extract_strided_slice %46 {offsets = [0, 32], sizes = [2, 32], strides = [1, 1]} : vector<2x64xf32> to vector<2x32xf32>
    %49 = vector.extract_strided_slice %18 {offsets = [2, 0], sizes = [2, 256], strides = [1, 1]} : vector<16x256xf32> to vector<2x256xf32>
    %cst_16 = arith.constant dense<0.000000e+00> : vector<2x256xf32>
    %50 = tpu.matmul %46, %19, %cst_16 {dimension_numbers = #tpu.dot_dimension_numbers<[1], [0], [0], [1], [0, 0, 1, 1], [], []>} : vector<2x64xf32>, vector<64x256xf32>, vector<2x256xf32> -> vector<2x256xf32>
    %51 = arith.addf %49, %50 : vector<2x256xf32>
    %52 = vector.extract_strided_slice %51 {offsets = [0, 0], sizes = [2, 64], strides = [1, 1]} : vector<2x256xf32> to vector<2x64xf32>
    %53 = arith.negf %52 : vector<2x64xf32>
    %54 = math.exp %53 : vector<2x64xf32>
    %cst_17 = arith.constant 1.000000e+00 : f32
    %55 = vector.broadcast %cst_17 : f32 to vector<2x64xf32>
    %56 = arith.addf %55, %54 : vector<2x64xf32>
    %57 = arith.divf %55, %56 : vector<2x64xf32>
    %58 = vector.extract_strided_slice %51 {offsets = [0, 64], sizes = [2, 64], strides = [1, 1]} : vector<2x256xf32> to vector<2x64xf32>
    %59 = arith.negf %58 : vector<2x64xf32>
    %60 = math.exp %59 : vector<2x64xf32>
    %cst_18 = arith.constant 1.000000e+00 : f32
    %61 = vector.broadcast %cst_18 : f32 to vector<2x64xf32>
    %62 = arith.addf %61, %60 : vector<2x64xf32>
    %63 = arith.divf %61, %62 : vector<2x64xf32>
    %64 = vector.extract_strided_slice %51 {offsets = [0, 128], sizes = [2, 64], strides = [1, 1]} : vector<2x256xf32> to vector<2x64xf32>
    %65 = math.tanh %64 : vector<2x64xf32>
    %66 = vector.extract_strided_slice %51 {offsets = [0, 192], sizes = [2, 64], strides = [1, 1]} : vector<2x256xf32> to vector<2x64xf32>
    %67 = arith.negf %66 : vector<2x64xf32>
    %68 = math.exp %67 : vector<2x64xf32>
    %cst_19 = arith.constant 1.000000e+00 : f32
    %69 = vector.broadcast %cst_19 : f32 to vector<2x64xf32>
    %70 = arith.addf %69, %68 : vector<2x64xf32>
    %71 = arith.divf %69, %70 : vector<2x64xf32>
    %72 = arith.mulf %63, %44 : vector<2x64xf32>
    %73 = arith.mulf %57, %65 : vector<2x64xf32>
    %74 = arith.addf %72, %73 : vector<2x64xf32>
    %75 = math.tanh %74 : vector<2x64xf32>
    %76 = arith.mulf %71, %75 : vector<2x64xf32>
    %77 = vector.extract_strided_slice %76 {offsets = [0, 0], sizes = [2, 32], strides = [1, 1]} : vector<2x64xf32> to vector<2x32xf32>
    %78 = vector.extract_strided_slice %76 {offsets = [0, 32], sizes = [2, 32], strides = [1, 1]} : vector<2x64xf32> to vector<2x32xf32>
    %79 = vector.extract_strided_slice %18 {offsets = [4, 0], sizes = [2, 256], strides = [1, 1]} : vector<16x256xf32> to vector<2x256xf32>
    %cst_20 = arith.constant dense<0.000000e+00> : vector<2x256xf32>
    %80 = tpu.matmul %76, %19, %cst_20 {dimension_numbers = #tpu.dot_dimension_numbers<[1], [0], [0], [1], [0, 0, 1, 1], [], []>} : vector<2x64xf32>, vector<64x256xf32>, vector<2x256xf32> -> vector<2x256xf32>
    %81 = arith.addf %79, %80 : vector<2x256xf32>
    %82 = vector.extract_strided_slice %81 {offsets = [0, 0], sizes = [2, 64], strides = [1, 1]} : vector<2x256xf32> to vector<2x64xf32>
    %83 = arith.negf %82 : vector<2x64xf32>
    %84 = math.exp %83 : vector<2x64xf32>
    %cst_21 = arith.constant 1.000000e+00 : f32
    %85 = vector.broadcast %cst_21 : f32 to vector<2x64xf32>
    %86 = arith.addf %85, %84 : vector<2x64xf32>
    %87 = arith.divf %85, %86 : vector<2x64xf32>
    %88 = vector.extract_strided_slice %81 {offsets = [0, 64], sizes = [2, 64], strides = [1, 1]} : vector<2x256xf32> to vector<2x64xf32>
    %89 = arith.negf %88 : vector<2x64xf32>
    %90 = math.exp %89 : vector<2x64xf32>
    %cst_22 = arith.constant 1.000000e+00 : f32
    %91 = vector.broadcast %cst_22 : f32 to vector<2x64xf32>
    %92 = arith.addf %91, %90 : vector<2x64xf32>
    %93 = arith.divf %91, %92 : vector<2x64xf32>
    %94 = vector.extract_strided_slice %81 {offsets = [0, 128], sizes = [2, 64], strides = [1, 1]} : vector<2x256xf32> to vector<2x64xf32>
    %95 = math.tanh %94 : vector<2x64xf32>
    %96 = vector.extract_strided_slice %81 {offsets = [0, 192], sizes = [2, 64], strides = [1, 1]} : vector<2x256xf32> to vector<2x64xf32>
    %97 = arith.negf %96 : vector<2x64xf32>
    %98 = math.exp %97 : vector<2x64xf32>
    %cst_23 = arith.constant 1.000000e+00 : f32
    %99 = vector.broadcast %cst_23 : f32 to vector<2x64xf32>
    %100 = arith.addf %99, %98 : vector<2x64xf32>
    %101 = arith.divf %99, %100 : vector<2x64xf32>
    %102 = arith.mulf %93, %74 : vector<2x64xf32>
    %103 = arith.mulf %87, %95 : vector<2x64xf32>
    %104 = arith.addf %102, %103 : vector<2x64xf32>
    %105 = math.tanh %104 : vector<2x64xf32>
    %106 = arith.mulf %101, %105 : vector<2x64xf32>
    %107 = vector.extract_strided_slice %106 {offsets = [0, 0], sizes = [2, 32], strides = [1, 1]} : vector<2x64xf32> to vector<2x32xf32>
    %108 = vector.extract_strided_slice %106 {offsets = [0, 32], sizes = [2, 32], strides = [1, 1]} : vector<2x64xf32> to vector<2x32xf32>
    %109 = vector.extract_strided_slice %18 {offsets = [6, 0], sizes = [2, 256], strides = [1, 1]} : vector<16x256xf32> to vector<2x256xf32>
    %cst_24 = arith.constant dense<0.000000e+00> : vector<2x256xf32>
    %110 = tpu.matmul %106, %19, %cst_24 {dimension_numbers = #tpu.dot_dimension_numbers<[1], [0], [0], [1], [0, 0, 1, 1], [], []>} : vector<2x64xf32>, vector<64x256xf32>, vector<2x256xf32> -> vector<2x256xf32>
    %111 = arith.addf %109, %110 : vector<2x256xf32>
    %112 = vector.extract_strided_slice %111 {offsets = [0, 0], sizes = [2, 64], strides = [1, 1]} : vector<2x256xf32> to vector<2x64xf32>
    %113 = arith.negf %112 : vector<2x64xf32>
    %114 = math.exp %113 : vector<2x64xf32>
    %cst_25 = arith.constant 1.000000e+00 : f32
    %115 = vector.broadcast %cst_25 : f32 to vector<2x64xf32>
    %116 = arith.addf %115, %114 : vector<2x64xf32>
    %117 = arith.divf %115, %116 : vector<2x64xf32>
    %118 = vector.extract_strided_slice %111 {offsets = [0, 64], sizes = [2, 64], strides = [1, 1]} : vector<2x256xf32> to vector<2x64xf32>
    %119 = arith.negf %118 : vector<2x64xf32>
    %120 = math.exp %119 : vector<2x64xf32>
    %cst_26 = arith.constant 1.000000e+00 : f32
    %121 = vector.broadcast %cst_26 : f32 to vector<2x64xf32>
    %122 = arith.addf %121, %120 : vector<2x64xf32>
    %123 = arith.divf %121, %122 : vector<2x64xf32>
    %124 = vector.extract_strided_slice %111 {offsets = [0, 128], sizes = [2, 64], strides = [1, 1]} : vector<2x256xf32> to vector<2x64xf32>
    %125 = math.tanh %124 : vector<2x64xf32>
    %126 = vector.extract_strided_slice %111 {offsets = [0, 192], sizes = [2, 64], strides = [1, 1]} : vector<2x256xf32> to vector<2x64xf32>
    %127 = arith.negf %126 : vector<2x64xf32>
    %128 = math.exp %127 : vector<2x64xf32>
    %cst_27 = arith.constant 1.000000e+00 : f32
    %129 = vector.broadcast %cst_27 : f32 to vector<2x64xf32>
    %130 = arith.addf %129, %128 : vector<2x64xf32>
    %131 = arith.divf %129, %130 : vector<2x64xf32>
    %132 = arith.mulf %123, %104 : vector<2x64xf32>
    %133 = arith.mulf %117, %125 : vector<2x64xf32>
    %134 = arith.addf %132, %133 : vector<2x64xf32>
    %135 = math.tanh %134 : vector<2x64xf32>
    %136 = arith.mulf %131, %135 : vector<2x64xf32>
    %137 = vector.extract_strided_slice %136 {offsets = [0, 0], sizes = [2, 32], strides = [1, 1]} : vector<2x64xf32> to vector<2x32xf32>
    %138 = vector.extract_strided_slice %136 {offsets = [0, 32], sizes = [2, 32], strides = [1, 1]} : vector<2x64xf32> to vector<2x32xf32>
    %139 = vector.extract_strided_slice %18 {offsets = [8, 0], sizes = [2, 256], strides = [1, 1]} : vector<16x256xf32> to vector<2x256xf32>
    %cst_28 = arith.constant dense<0.000000e+00> : vector<2x256xf32>
    %140 = tpu.matmul %136, %19, %cst_28 {dimension_numbers = #tpu.dot_dimension_numbers<[1], [0], [0], [1], [0, 0, 1, 1], [], []>} : vector<2x64xf32>, vector<64x256xf32>, vector<2x256xf32> -> vector<2x256xf32>
    %141 = arith.addf %139, %140 : vector<2x256xf32>
    %142 = vector.extract_strided_slice %141 {offsets = [0, 0], sizes = [2, 64], strides = [1, 1]} : vector<2x256xf32> to vector<2x64xf32>
    %143 = arith.negf %142 : vector<2x64xf32>
    %144 = math.exp %143 : vector<2x64xf32>
    %cst_29 = arith.constant 1.000000e+00 : f32
    %145 = vector.broadcast %cst_29 : f32 to vector<2x64xf32>
    %146 = arith.addf %145, %144 : vector<2x64xf32>
    %147 = arith.divf %145, %146 : vector<2x64xf32>
    %148 = vector.extract_strided_slice %141 {offsets = [0, 64], sizes = [2, 64], strides = [1, 1]} : vector<2x256xf32> to vector<2x64xf32>
    %149 = arith.negf %148 : vector<2x64xf32>
    %150 = math.exp %149 : vector<2x64xf32>
    %cst_30 = arith.constant 1.000000e+00 : f32
    %151 = vector.broadcast %cst_30 : f32 to vector<2x64xf32>
    %152 = arith.addf %151, %150 : vector<2x64xf32>
    %153 = arith.divf %151, %152 : vector<2x64xf32>
    %154 = vector.extract_strided_slice %141 {offsets = [0, 128], sizes = [2, 64], strides = [1, 1]} : vector<2x256xf32> to vector<2x64xf32>
    %155 = math.tanh %154 : vector<2x64xf32>
    %156 = vector.extract_strided_slice %141 {offsets = [0, 192], sizes = [2, 64], strides = [1, 1]} : vector<2x256xf32> to vector<2x64xf32>
    %157 = arith.negf %156 : vector<2x64xf32>
    %158 = math.exp %157 : vector<2x64xf32>
    %cst_31 = arith.constant 1.000000e+00 : f32
    %159 = vector.broadcast %cst_31 : f32 to vector<2x64xf32>
    %160 = arith.addf %159, %158 : vector<2x64xf32>
    %161 = arith.divf %159, %160 : vector<2x64xf32>
    %162 = arith.mulf %153, %134 : vector<2x64xf32>
    %163 = arith.mulf %147, %155 : vector<2x64xf32>
    %164 = arith.addf %162, %163 : vector<2x64xf32>
    %165 = math.tanh %164 : vector<2x64xf32>
    %166 = arith.mulf %161, %165 : vector<2x64xf32>
    %167 = vector.extract_strided_slice %166 {offsets = [0, 0], sizes = [2, 32], strides = [1, 1]} : vector<2x64xf32> to vector<2x32xf32>
    %168 = vector.extract_strided_slice %166 {offsets = [0, 32], sizes = [2, 32], strides = [1, 1]} : vector<2x64xf32> to vector<2x32xf32>
    %169 = vector.extract_strided_slice %18 {offsets = [10, 0], sizes = [2, 256], strides = [1, 1]} : vector<16x256xf32> to vector<2x256xf32>
    %cst_32 = arith.constant dense<0.000000e+00> : vector<2x256xf32>
    %170 = tpu.matmul %166, %19, %cst_32 {dimension_numbers = #tpu.dot_dimension_numbers<[1], [0], [0], [1], [0, 0, 1, 1], [], []>} : vector<2x64xf32>, vector<64x256xf32>, vector<2x256xf32> -> vector<2x256xf32>
    %171 = arith.addf %169, %170 : vector<2x256xf32>
    %172 = vector.extract_strided_slice %171 {offsets = [0, 0], sizes = [2, 64], strides = [1, 1]} : vector<2x256xf32> to vector<2x64xf32>
    %173 = arith.negf %172 : vector<2x64xf32>
    %174 = math.exp %173 : vector<2x64xf32>
    %cst_33 = arith.constant 1.000000e+00 : f32
    %175 = vector.broadcast %cst_33 : f32 to vector<2x64xf32>
    %176 = arith.addf %175, %174 : vector<2x64xf32>
    %177 = arith.divf %175, %176 : vector<2x64xf32>
    %178 = vector.extract_strided_slice %171 {offsets = [0, 64], sizes = [2, 64], strides = [1, 1]} : vector<2x256xf32> to vector<2x64xf32>
    %179 = arith.negf %178 : vector<2x64xf32>
    %180 = math.exp %179 : vector<2x64xf32>
    %cst_34 = arith.constant 1.000000e+00 : f32
    %181 = vector.broadcast %cst_34 : f32 to vector<2x64xf32>
    %182 = arith.addf %181, %180 : vector<2x64xf32>
    %183 = arith.divf %181, %182 : vector<2x64xf32>
    %184 = vector.extract_strided_slice %171 {offsets = [0, 128], sizes = [2, 64], strides = [1, 1]} : vector<2x256xf32> to vector<2x64xf32>
    %185 = math.tanh %184 : vector<2x64xf32>
    %186 = vector.extract_strided_slice %171 {offsets = [0, 192], sizes = [2, 64], strides = [1, 1]} : vector<2x256xf32> to vector<2x64xf32>
    %187 = arith.negf %186 : vector<2x64xf32>
    %188 = math.exp %187 : vector<2x64xf32>
    %cst_35 = arith.constant 1.000000e+00 : f32
    %189 = vector.broadcast %cst_35 : f32 to vector<2x64xf32>
    %190 = arith.addf %189, %188 : vector<2x64xf32>
    %191 = arith.divf %189, %190 : vector<2x64xf32>
    %192 = arith.mulf %183, %164 : vector<2x64xf32>
    %193 = arith.mulf %177, %185 : vector<2x64xf32>
    %194 = arith.addf %192, %193 : vector<2x64xf32>
    %195 = math.tanh %194 : vector<2x64xf32>
    %196 = arith.mulf %191, %195 : vector<2x64xf32>
    %197 = vector.extract_strided_slice %196 {offsets = [0, 0], sizes = [2, 32], strides = [1, 1]} : vector<2x64xf32> to vector<2x32xf32>
    %198 = vector.extract_strided_slice %196 {offsets = [0, 32], sizes = [2, 32], strides = [1, 1]} : vector<2x64xf32> to vector<2x32xf32>
    %199 = vector.extract_strided_slice %18 {offsets = [12, 0], sizes = [2, 256], strides = [1, 1]} : vector<16x256xf32> to vector<2x256xf32>
    %cst_36 = arith.constant dense<0.000000e+00> : vector<2x256xf32>
    %200 = tpu.matmul %196, %19, %cst_36 {dimension_numbers = #tpu.dot_dimension_numbers<[1], [0], [0], [1], [0, 0, 1, 1], [], []>} : vector<2x64xf32>, vector<64x256xf32>, vector<2x256xf32> -> vector<2x256xf32>
    %201 = arith.addf %199, %200 : vector<2x256xf32>
    %202 = vector.extract_strided_slice %201 {offsets = [0, 0], sizes = [2, 64], strides = [1, 1]} : vector<2x256xf32> to vector<2x64xf32>
    %203 = arith.negf %202 : vector<2x64xf32>
    %204 = math.exp %203 : vector<2x64xf32>
    %cst_37 = arith.constant 1.000000e+00 : f32
    %205 = vector.broadcast %cst_37 : f32 to vector<2x64xf32>
    %206 = arith.addf %205, %204 : vector<2x64xf32>
    %207 = arith.divf %205, %206 : vector<2x64xf32>
    %208 = vector.extract_strided_slice %201 {offsets = [0, 64], sizes = [2, 64], strides = [1, 1]} : vector<2x256xf32> to vector<2x64xf32>
    %209 = arith.negf %208 : vector<2x64xf32>
    %210 = math.exp %209 : vector<2x64xf32>
    %cst_38 = arith.constant 1.000000e+00 : f32
    %211 = vector.broadcast %cst_38 : f32 to vector<2x64xf32>
    %212 = arith.addf %211, %210 : vector<2x64xf32>
    %213 = arith.divf %211, %212 : vector<2x64xf32>
    %214 = vector.extract_strided_slice %201 {offsets = [0, 128], sizes = [2, 64], strides = [1, 1]} : vector<2x256xf32> to vector<2x64xf32>
    %215 = math.tanh %214 : vector<2x64xf32>
    %216 = vector.extract_strided_slice %201 {offsets = [0, 192], sizes = [2, 64], strides = [1, 1]} : vector<2x256xf32> to vector<2x64xf32>
    %217 = arith.negf %216 : vector<2x64xf32>
    %218 = math.exp %217 : vector<2x64xf32>
    %cst_39 = arith.constant 1.000000e+00 : f32
    %219 = vector.broadcast %cst_39 : f32 to vector<2x64xf32>
    %220 = arith.addf %219, %218 : vector<2x64xf32>
    %221 = arith.divf %219, %220 : vector<2x64xf32>
    %222 = arith.mulf %213, %194 : vector<2x64xf32>
    %223 = arith.mulf %207, %215 : vector<2x64xf32>
    %224 = arith.addf %222, %223 : vector<2x64xf32>
    %225 = math.tanh %224 : vector<2x64xf32>
    %226 = arith.mulf %221, %225 : vector<2x64xf32>
    %227 = vector.extract_strided_slice %226 {offsets = [0, 0], sizes = [2, 32], strides = [1, 1]} : vector<2x64xf32> to vector<2x32xf32>
    %228 = vector.extract_strided_slice %226 {offsets = [0, 32], sizes = [2, 32], strides = [1, 1]} : vector<2x64xf32> to vector<2x32xf32>
    %229 = vector.extract_strided_slice %18 {offsets = [14, 0], sizes = [2, 256], strides = [1, 1]} : vector<16x256xf32> to vector<2x256xf32>
    %cst_40 = arith.constant dense<0.000000e+00> : vector<2x256xf32>
    %230 = tpu.matmul %226, %19, %cst_40 {dimension_numbers = #tpu.dot_dimension_numbers<[1], [0], [0], [1], [0, 0, 1, 1], [], []>} : vector<2x64xf32>, vector<64x256xf32>, vector<2x256xf32> -> vector<2x256xf32>
    %231 = arith.addf %229, %230 : vector<2x256xf32>
    %232 = vector.extract_strided_slice %231 {offsets = [0, 0], sizes = [2, 64], strides = [1, 1]} : vector<2x256xf32> to vector<2x64xf32>
    %233 = arith.negf %232 : vector<2x64xf32>
    %234 = math.exp %233 : vector<2x64xf32>
    %cst_41 = arith.constant 1.000000e+00 : f32
    %235 = vector.broadcast %cst_41 : f32 to vector<2x64xf32>
    %236 = arith.addf %235, %234 : vector<2x64xf32>
    %237 = arith.divf %235, %236 : vector<2x64xf32>
    %238 = vector.extract_strided_slice %231 {offsets = [0, 64], sizes = [2, 64], strides = [1, 1]} : vector<2x256xf32> to vector<2x64xf32>
    %239 = arith.negf %238 : vector<2x64xf32>
    %240 = math.exp %239 : vector<2x64xf32>
    %cst_42 = arith.constant 1.000000e+00 : f32
    %241 = vector.broadcast %cst_42 : f32 to vector<2x64xf32>
    %242 = arith.addf %241, %240 : vector<2x64xf32>
    %243 = arith.divf %241, %242 : vector<2x64xf32>
    %244 = vector.extract_strided_slice %231 {offsets = [0, 128], sizes = [2, 64], strides = [1, 1]} : vector<2x256xf32> to vector<2x64xf32>
    %245 = math.tanh %244 : vector<2x64xf32>
    %246 = vector.extract_strided_slice %231 {offsets = [0, 192], sizes = [2, 64], strides = [1, 1]} : vector<2x256xf32> to vector<2x64xf32>
    %247 = arith.negf %246 : vector<2x64xf32>
    %248 = math.exp %247 : vector<2x64xf32>
    %cst_43 = arith.constant 1.000000e+00 : f32
    %249 = vector.broadcast %cst_43 : f32 to vector<2x64xf32>
    %250 = arith.addf %249, %248 : vector<2x64xf32>
    %251 = arith.divf %249, %250 : vector<2x64xf32>
    %252 = arith.mulf %243, %224 : vector<2x64xf32>
    %253 = arith.mulf %237, %245 : vector<2x64xf32>
    %254 = arith.addf %252, %253 : vector<2x64xf32>
    %255 = math.tanh %254 : vector<2x64xf32>
    %256 = arith.mulf %251, %255 : vector<2x64xf32>
    %257 = vector.extract_strided_slice %256 {offsets = [0, 0], sizes = [2, 32], strides = [1, 1]} : vector<2x64xf32> to vector<2x32xf32>
    %258 = vector.extract_strided_slice %256 {offsets = [0, 32], sizes = [2, 32], strides = [1, 1]} : vector<2x64xf32> to vector<2x32xf32>
    %259 = tpu.concatenate %47, %258, %257, %48 in 1 : vector<2x32xf32>, vector<2x32xf32>, vector<2x32xf32>, vector<2x32xf32> -> vector<2x128xf32>
    %260 = tpu.concatenate %77, %228, %227, %78 in 1 : vector<2x32xf32>, vector<2x32xf32>, vector<2x32xf32>, vector<2x32xf32> -> vector<2x128xf32>
    %261 = tpu.concatenate %107, %198, %197, %108 in 1 : vector<2x32xf32>, vector<2x32xf32>, vector<2x32xf32>, vector<2x32xf32> -> vector<2x128xf32>
    %262 = tpu.concatenate %137, %168, %167, %138 in 1 : vector<2x32xf32>, vector<2x32xf32>, vector<2x32xf32>, vector<2x32xf32> -> vector<2x128xf32>
    %263 = tpu.concatenate %167, %138, %137, %168 in 1 : vector<2x32xf32>, vector<2x32xf32>, vector<2x32xf32>, vector<2x32xf32> -> vector<2x128xf32>
    %264 = tpu.concatenate %197, %108, %107, %198 in 1 : vector<2x32xf32>, vector<2x32xf32>, vector<2x32xf32>, vector<2x32xf32> -> vector<2x128xf32>
    %265 = tpu.concatenate %227, %78, %77, %228 in 1 : vector<2x32xf32>, vector<2x32xf32>, vector<2x32xf32>, vector<2x32xf32> -> vector<2x128xf32>
    %266 = tpu.concatenate %257, %48, %47, %258 in 1 : vector<2x32xf32>, vector<2x32xf32>, vector<2x32xf32>, vector<2x32xf32> -> vector<2x128xf32>
    %267 = tpu.concatenate %259, %260, %261, %262, %263, %264, %265, %266 in 0 : vector<2x128xf32>, vector<2x128xf32>, vector<2x128xf32>, vector<2x128xf32>, vector<2x128xf32>, vector<2x128xf32>, vector<2x128xf32>, vector<2x128xf32> -> vector<16x128xf32>
    %c0_44 = arith.constant 0 : index
    %c0_45 = arith.constant 0 : index
    %268 = vector.load %arg6[%c0_44, %c0_45] : memref<128x256xf32, #tpu.memory_space<vmem>>, vector<128x256xf32>
    %cst_46 = arith.constant dense<0.000000e+00> : vector<16x256xf32>
    %269 = tpu.matmul %267, %268, %cst_46 {dimension_numbers = #tpu.dot_dimension_numbers<[1], [0], [0], [1], [0, 0, 1, 1], [], []>} : vector<16x128xf32>, vector<128x256xf32>, vector<16x256xf32> -> vector<16x256xf32>
    %c0_47 = arith.constant 0 : index
    %c0_48 = arith.constant 0 : index
    %270 = vector.load %arg8[%c0_47, %c0_48] : memref<1x256xf32, #tpu.memory_space<vmem>>, vector<1x256xf32>
    %271 = vector.broadcast %270 : vector<1x256xf32> to vector<16x256xf32>
    %272 = arith.addf %269, %271 : vector<16x256xf32>
    %c0_49 = arith.constant 0 : index
    %c0_50 = arith.constant 0 : index
    %273 = vector.load %arg7[%c0_49, %c0_50] : memref<64x256xf32, #tpu.memory_space<vmem>>, vector<64x256xf32>
    %cst_51 = arith.constant 0.000000e+00 : f32
    %274 = vector.broadcast %cst_51 : f32 to vector<2x64xf32>
    %275 = vector.extract_strided_slice %272 {offsets = [0, 0], sizes = [2, 256], strides = [1, 1]} : vector<16x256xf32> to vector<2x256xf32>
    %276 = vector.extract_strided_slice %275 {offsets = [0, 0], sizes = [2, 64], strides = [1, 1]} : vector<2x256xf32> to vector<2x64xf32>
    %277 = arith.negf %276 : vector<2x64xf32>
    %278 = math.exp %277 : vector<2x64xf32>
    %cst_52 = arith.constant 1.000000e+00 : f32
    %279 = vector.broadcast %cst_52 : f32 to vector<2x64xf32>
    %280 = arith.addf %279, %278 : vector<2x64xf32>
    %281 = arith.divf %279, %280 : vector<2x64xf32>
    %282 = vector.extract_strided_slice %275 {offsets = [0, 64], sizes = [2, 64], strides = [1, 1]} : vector<2x256xf32> to vector<2x64xf32>
    %283 = arith.negf %282 : vector<2x64xf32>
    %284 = math.exp %283 : vector<2x64xf32>
    %cst_53 = arith.constant 1.000000e+00 : f32
    %285 = vector.broadcast %cst_53 : f32 to vector<2x64xf32>
    %286 = arith.addf %285, %284 : vector<2x64xf32>
    %287 = arith.divf %285, %286 : vector<2x64xf32>
    %288 = vector.extract_strided_slice %275 {offsets = [0, 128], sizes = [2, 64], strides = [1, 1]} : vector<2x256xf32> to vector<2x64xf32>
    %289 = math.tanh %288 : vector<2x64xf32>
    %290 = vector.extract_strided_slice %275 {offsets = [0, 192], sizes = [2, 64], strides = [1, 1]} : vector<2x256xf32> to vector<2x64xf32>
    %291 = arith.negf %290 : vector<2x64xf32>
    %292 = math.exp %291 : vector<2x64xf32>
    %cst_54 = arith.constant 1.000000e+00 : f32
    %293 = vector.broadcast %cst_54 : f32 to vector<2x64xf32>
    %294 = arith.addf %293, %292 : vector<2x64xf32>
    %295 = arith.divf %293, %294 : vector<2x64xf32>
    %296 = arith.mulf %287, %274 : vector<2x64xf32>
    %297 = arith.mulf %281, %289 : vector<2x64xf32>
    %298 = arith.addf %296, %297 : vector<2x64xf32>
    %299 = math.tanh %298 : vector<2x64xf32>
    %300 = arith.mulf %295, %299 : vector<2x64xf32>
    %301 = vector.extract_strided_slice %272 {offsets = [2, 0], sizes = [2, 256], strides = [1, 1]} : vector<16x256xf32> to vector<2x256xf32>
    %cst_55 = arith.constant dense<0.000000e+00> : vector<2x256xf32>
    %302 = tpu.matmul %300, %273, %cst_55 {dimension_numbers = #tpu.dot_dimension_numbers<[1], [0], [0], [1], [0, 0, 1, 1], [], []>} : vector<2x64xf32>, vector<64x256xf32>, vector<2x256xf32> -> vector<2x256xf32>
    %303 = arith.addf %301, %302 : vector<2x256xf32>
    %304 = vector.extract_strided_slice %303 {offsets = [0, 0], sizes = [2, 64], strides = [1, 1]} : vector<2x256xf32> to vector<2x64xf32>
    %305 = arith.negf %304 : vector<2x64xf32>
    %306 = math.exp %305 : vector<2x64xf32>
    %cst_56 = arith.constant 1.000000e+00 : f32
    %307 = vector.broadcast %cst_56 : f32 to vector<2x64xf32>
    %308 = arith.addf %307, %306 : vector<2x64xf32>
    %309 = arith.divf %307, %308 : vector<2x64xf32>
    %310 = vector.extract_strided_slice %303 {offsets = [0, 64], sizes = [2, 64], strides = [1, 1]} : vector<2x256xf32> to vector<2x64xf32>
    %311 = arith.negf %310 : vector<2x64xf32>
    %312 = math.exp %311 : vector<2x64xf32>
    %cst_57 = arith.constant 1.000000e+00 : f32
    %313 = vector.broadcast %cst_57 : f32 to vector<2x64xf32>
    %314 = arith.addf %313, %312 : vector<2x64xf32>
    %315 = arith.divf %313, %314 : vector<2x64xf32>
    %316 = vector.extract_strided_slice %303 {offsets = [0, 128], sizes = [2, 64], strides = [1, 1]} : vector<2x256xf32> to vector<2x64xf32>
    %317 = math.tanh %316 : vector<2x64xf32>
    %318 = vector.extract_strided_slice %303 {offsets = [0, 192], sizes = [2, 64], strides = [1, 1]} : vector<2x256xf32> to vector<2x64xf32>
    %319 = arith.negf %318 : vector<2x64xf32>
    %320 = math.exp %319 : vector<2x64xf32>
    %cst_58 = arith.constant 1.000000e+00 : f32
    %321 = vector.broadcast %cst_58 : f32 to vector<2x64xf32>
    %322 = arith.addf %321, %320 : vector<2x64xf32>
    %323 = arith.divf %321, %322 : vector<2x64xf32>
    %324 = arith.mulf %315, %298 : vector<2x64xf32>
    %325 = arith.mulf %309, %317 : vector<2x64xf32>
    %326 = arith.addf %324, %325 : vector<2x64xf32>
    %327 = math.tanh %326 : vector<2x64xf32>
    %328 = arith.mulf %323, %327 : vector<2x64xf32>
    %329 = vector.extract_strided_slice %272 {offsets = [4, 0], sizes = [2, 256], strides = [1, 1]} : vector<16x256xf32> to vector<2x256xf32>
    %cst_59 = arith.constant dense<0.000000e+00> : vector<2x256xf32>
    %330 = tpu.matmul %328, %273, %cst_59 {dimension_numbers = #tpu.dot_dimension_numbers<[1], [0], [0], [1], [0, 0, 1, 1], [], []>} : vector<2x64xf32>, vector<64x256xf32>, vector<2x256xf32> -> vector<2x256xf32>
    %331 = arith.addf %329, %330 : vector<2x256xf32>
    %332 = vector.extract_strided_slice %331 {offsets = [0, 0], sizes = [2, 64], strides = [1, 1]} : vector<2x256xf32> to vector<2x64xf32>
    %333 = arith.negf %332 : vector<2x64xf32>
    %334 = math.exp %333 : vector<2x64xf32>
    %cst_60 = arith.constant 1.000000e+00 : f32
    %335 = vector.broadcast %cst_60 : f32 to vector<2x64xf32>
    %336 = arith.addf %335, %334 : vector<2x64xf32>
    %337 = arith.divf %335, %336 : vector<2x64xf32>
    %338 = vector.extract_strided_slice %331 {offsets = [0, 64], sizes = [2, 64], strides = [1, 1]} : vector<2x256xf32> to vector<2x64xf32>
    %339 = arith.negf %338 : vector<2x64xf32>
    %340 = math.exp %339 : vector<2x64xf32>
    %cst_61 = arith.constant 1.000000e+00 : f32
    %341 = vector.broadcast %cst_61 : f32 to vector<2x64xf32>
    %342 = arith.addf %341, %340 : vector<2x64xf32>
    %343 = arith.divf %341, %342 : vector<2x64xf32>
    %344 = vector.extract_strided_slice %331 {offsets = [0, 128], sizes = [2, 64], strides = [1, 1]} : vector<2x256xf32> to vector<2x64xf32>
    %345 = math.tanh %344 : vector<2x64xf32>
    %346 = vector.extract_strided_slice %331 {offsets = [0, 192], sizes = [2, 64], strides = [1, 1]} : vector<2x256xf32> to vector<2x64xf32>
    %347 = arith.negf %346 : vector<2x64xf32>
    %348 = math.exp %347 : vector<2x64xf32>
    %cst_62 = arith.constant 1.000000e+00 : f32
    %349 = vector.broadcast %cst_62 : f32 to vector<2x64xf32>
    %350 = arith.addf %349, %348 : vector<2x64xf32>
    %351 = arith.divf %349, %350 : vector<2x64xf32>
    %352 = arith.mulf %343, %326 : vector<2x64xf32>
    %353 = arith.mulf %337, %345 : vector<2x64xf32>
    %354 = arith.addf %352, %353 : vector<2x64xf32>
    %355 = math.tanh %354 : vector<2x64xf32>
    %356 = arith.mulf %351, %355 : vector<2x64xf32>
    %357 = vector.extract_strided_slice %272 {offsets = [6, 0], sizes = [2, 256], strides = [1, 1]} : vector<16x256xf32> to vector<2x256xf32>
    %cst_63 = arith.constant dense<0.000000e+00> : vector<2x256xf32>
    %358 = tpu.matmul %356, %273, %cst_63 {dimension_numbers = #tpu.dot_dimension_numbers<[1], [0], [0], [1], [0, 0, 1, 1], [], []>} : vector<2x64xf32>, vector<64x256xf32>, vector<2x256xf32> -> vector<2x256xf32>
    %359 = arith.addf %357, %358 : vector<2x256xf32>
    %360 = vector.extract_strided_slice %359 {offsets = [0, 0], sizes = [2, 64], strides = [1, 1]} : vector<2x256xf32> to vector<2x64xf32>
    %361 = arith.negf %360 : vector<2x64xf32>
    %362 = math.exp %361 : vector<2x64xf32>
    %cst_64 = arith.constant 1.000000e+00 : f32
    %363 = vector.broadcast %cst_64 : f32 to vector<2x64xf32>
    %364 = arith.addf %363, %362 : vector<2x64xf32>
    %365 = arith.divf %363, %364 : vector<2x64xf32>
    %366 = vector.extract_strided_slice %359 {offsets = [0, 64], sizes = [2, 64], strides = [1, 1]} : vector<2x256xf32> to vector<2x64xf32>
    %367 = arith.negf %366 : vector<2x64xf32>
    %368 = math.exp %367 : vector<2x64xf32>
    %cst_65 = arith.constant 1.000000e+00 : f32
    %369 = vector.broadcast %cst_65 : f32 to vector<2x64xf32>
    %370 = arith.addf %369, %368 : vector<2x64xf32>
    %371 = arith.divf %369, %370 : vector<2x64xf32>
    %372 = vector.extract_strided_slice %359 {offsets = [0, 128], sizes = [2, 64], strides = [1, 1]} : vector<2x256xf32> to vector<2x64xf32>
    %373 = math.tanh %372 : vector<2x64xf32>
    %374 = vector.extract_strided_slice %359 {offsets = [0, 192], sizes = [2, 64], strides = [1, 1]} : vector<2x256xf32> to vector<2x64xf32>
    %375 = arith.negf %374 : vector<2x64xf32>
    %376 = math.exp %375 : vector<2x64xf32>
    %cst_66 = arith.constant 1.000000e+00 : f32
    %377 = vector.broadcast %cst_66 : f32 to vector<2x64xf32>
    %378 = arith.addf %377, %376 : vector<2x64xf32>
    %379 = arith.divf %377, %378 : vector<2x64xf32>
    %380 = arith.mulf %371, %354 : vector<2x64xf32>
    %381 = arith.mulf %365, %373 : vector<2x64xf32>
    %382 = arith.addf %380, %381 : vector<2x64xf32>
    %383 = math.tanh %382 : vector<2x64xf32>
    %384 = arith.mulf %379, %383 : vector<2x64xf32>
    %385 = vector.extract_strided_slice %272 {offsets = [8, 0], sizes = [2, 256], strides = [1, 1]} : vector<16x256xf32> to vector<2x256xf32>
    %cst_67 = arith.constant dense<0.000000e+00> : vector<2x256xf32>
    %386 = tpu.matmul %384, %273, %cst_67 {dimension_numbers = #tpu.dot_dimension_numbers<[1], [0], [0], [1], [0, 0, 1, 1], [], []>} : vector<2x64xf32>, vector<64x256xf32>, vector<2x256xf32> -> vector<2x256xf32>
    %387 = arith.addf %385, %386 : vector<2x256xf32>
    %388 = vector.extract_strided_slice %387 {offsets = [0, 0], sizes = [2, 64], strides = [1, 1]} : vector<2x256xf32> to vector<2x64xf32>
    %389 = arith.negf %388 : vector<2x64xf32>
    %390 = math.exp %389 : vector<2x64xf32>
    %cst_68 = arith.constant 1.000000e+00 : f32
    %391 = vector.broadcast %cst_68 : f32 to vector<2x64xf32>
    %392 = arith.addf %391, %390 : vector<2x64xf32>
    %393 = arith.divf %391, %392 : vector<2x64xf32>
    %394 = vector.extract_strided_slice %387 {offsets = [0, 64], sizes = [2, 64], strides = [1, 1]} : vector<2x256xf32> to vector<2x64xf32>
    %395 = arith.negf %394 : vector<2x64xf32>
    %396 = math.exp %395 : vector<2x64xf32>
    %cst_69 = arith.constant 1.000000e+00 : f32
    %397 = vector.broadcast %cst_69 : f32 to vector<2x64xf32>
    %398 = arith.addf %397, %396 : vector<2x64xf32>
    %399 = arith.divf %397, %398 : vector<2x64xf32>
    %400 = vector.extract_strided_slice %387 {offsets = [0, 128], sizes = [2, 64], strides = [1, 1]} : vector<2x256xf32> to vector<2x64xf32>
    %401 = math.tanh %400 : vector<2x64xf32>
    %402 = vector.extract_strided_slice %387 {offsets = [0, 192], sizes = [2, 64], strides = [1, 1]} : vector<2x256xf32> to vector<2x64xf32>
    %403 = arith.negf %402 : vector<2x64xf32>
    %404 = math.exp %403 : vector<2x64xf32>
    %cst_70 = arith.constant 1.000000e+00 : f32
    %405 = vector.broadcast %cst_70 : f32 to vector<2x64xf32>
    %406 = arith.addf %405, %404 : vector<2x64xf32>
    %407 = arith.divf %405, %406 : vector<2x64xf32>
    %408 = arith.mulf %399, %382 : vector<2x64xf32>
    %409 = arith.mulf %393, %401 : vector<2x64xf32>
    %410 = arith.addf %408, %409 : vector<2x64xf32>
    %411 = math.tanh %410 : vector<2x64xf32>
    %412 = arith.mulf %407, %411 : vector<2x64xf32>
    %413 = vector.extract_strided_slice %272 {offsets = [10, 0], sizes = [2, 256], strides = [1, 1]} : vector<16x256xf32> to vector<2x256xf32>
    %cst_71 = arith.constant dense<0.000000e+00> : vector<2x256xf32>
    %414 = tpu.matmul %412, %273, %cst_71 {dimension_numbers = #tpu.dot_dimension_numbers<[1], [0], [0], [1], [0, 0, 1, 1], [], []>} : vector<2x64xf32>, vector<64x256xf32>, vector<2x256xf32> -> vector<2x256xf32>
    %415 = arith.addf %413, %414 : vector<2x256xf32>
    %416 = vector.extract_strided_slice %415 {offsets = [0, 0], sizes = [2, 64], strides = [1, 1]} : vector<2x256xf32> to vector<2x64xf32>
    %417 = arith.negf %416 : vector<2x64xf32>
    %418 = math.exp %417 : vector<2x64xf32>
    %cst_72 = arith.constant 1.000000e+00 : f32
    %419 = vector.broadcast %cst_72 : f32 to vector<2x64xf32>
    %420 = arith.addf %419, %418 : vector<2x64xf32>
    %421 = arith.divf %419, %420 : vector<2x64xf32>
    %422 = vector.extract_strided_slice %415 {offsets = [0, 64], sizes = [2, 64], strides = [1, 1]} : vector<2x256xf32> to vector<2x64xf32>
    %423 = arith.negf %422 : vector<2x64xf32>
    %424 = math.exp %423 : vector<2x64xf32>
    %cst_73 = arith.constant 1.000000e+00 : f32
    %425 = vector.broadcast %cst_73 : f32 to vector<2x64xf32>
    %426 = arith.addf %425, %424 : vector<2x64xf32>
    %427 = arith.divf %425, %426 : vector<2x64xf32>
    %428 = vector.extract_strided_slice %415 {offsets = [0, 128], sizes = [2, 64], strides = [1, 1]} : vector<2x256xf32> to vector<2x64xf32>
    %429 = math.tanh %428 : vector<2x64xf32>
    %430 = vector.extract_strided_slice %415 {offsets = [0, 192], sizes = [2, 64], strides = [1, 1]} : vector<2x256xf32> to vector<2x64xf32>
    %431 = arith.negf %430 : vector<2x64xf32>
    %432 = math.exp %431 : vector<2x64xf32>
    %cst_74 = arith.constant 1.000000e+00 : f32
    %433 = vector.broadcast %cst_74 : f32 to vector<2x64xf32>
    %434 = arith.addf %433, %432 : vector<2x64xf32>
    %435 = arith.divf %433, %434 : vector<2x64xf32>
    %436 = arith.mulf %427, %410 : vector<2x64xf32>
    %437 = arith.mulf %421, %429 : vector<2x64xf32>
    %438 = arith.addf %436, %437 : vector<2x64xf32>
    %439 = math.tanh %438 : vector<2x64xf32>
    %440 = arith.mulf %435, %439 : vector<2x64xf32>
    %441 = vector.extract_strided_slice %272 {offsets = [12, 0], sizes = [2, 256], strides = [1, 1]} : vector<16x256xf32> to vector<2x256xf32>
    %cst_75 = arith.constant dense<0.000000e+00> : vector<2x256xf32>
    %442 = tpu.matmul %440, %273, %cst_75 {dimension_numbers = #tpu.dot_dimension_numbers<[1], [0], [0], [1], [0, 0, 1, 1], [], []>} : vector<2x64xf32>, vector<64x256xf32>, vector<2x256xf32> -> vector<2x256xf32>
    %443 = arith.addf %441, %442 : vector<2x256xf32>
    %444 = vector.extract_strided_slice %443 {offsets = [0, 0], sizes = [2, 64], strides = [1, 1]} : vector<2x256xf32> to vector<2x64xf32>
    %445 = arith.negf %444 : vector<2x64xf32>
    %446 = math.exp %445 : vector<2x64xf32>
    %cst_76 = arith.constant 1.000000e+00 : f32
    %447 = vector.broadcast %cst_76 : f32 to vector<2x64xf32>
    %448 = arith.addf %447, %446 : vector<2x64xf32>
    %449 = arith.divf %447, %448 : vector<2x64xf32>
    %450 = vector.extract_strided_slice %443 {offsets = [0, 64], sizes = [2, 64], strides = [1, 1]} : vector<2x256xf32> to vector<2x64xf32>
    %451 = arith.negf %450 : vector<2x64xf32>
    %452 = math.exp %451 : vector<2x64xf32>
    %cst_77 = arith.constant 1.000000e+00 : f32
    %453 = vector.broadcast %cst_77 : f32 to vector<2x64xf32>
    %454 = arith.addf %453, %452 : vector<2x64xf32>
    %455 = arith.divf %453, %454 : vector<2x64xf32>
    %456 = vector.extract_strided_slice %443 {offsets = [0, 128], sizes = [2, 64], strides = [1, 1]} : vector<2x256xf32> to vector<2x64xf32>
    %457 = math.tanh %456 : vector<2x64xf32>
    %458 = vector.extract_strided_slice %443 {offsets = [0, 192], sizes = [2, 64], strides = [1, 1]} : vector<2x256xf32> to vector<2x64xf32>
    %459 = arith.negf %458 : vector<2x64xf32>
    %460 = math.exp %459 : vector<2x64xf32>
    %cst_78 = arith.constant 1.000000e+00 : f32
    %461 = vector.broadcast %cst_78 : f32 to vector<2x64xf32>
    %462 = arith.addf %461, %460 : vector<2x64xf32>
    %463 = arith.divf %461, %462 : vector<2x64xf32>
    %464 = arith.mulf %455, %438 : vector<2x64xf32>
    %465 = arith.mulf %449, %457 : vector<2x64xf32>
    %466 = arith.addf %464, %465 : vector<2x64xf32>
    %467 = math.tanh %466 : vector<2x64xf32>
    %468 = arith.mulf %463, %467 : vector<2x64xf32>
    %469 = vector.extract_strided_slice %272 {offsets = [14, 0], sizes = [2, 256], strides = [1, 1]} : vector<16x256xf32> to vector<2x256xf32>
    %cst_79 = arith.constant dense<0.000000e+00> : vector<2x256xf32>
    %470 = tpu.matmul %468, %273, %cst_79 {dimension_numbers = #tpu.dot_dimension_numbers<[1], [0], [0], [1], [0, 0, 1, 1], [], []>} : vector<2x64xf32>, vector<64x256xf32>, vector<2x256xf32> -> vector<2x256xf32>
    %471 = arith.addf %469, %470 : vector<2x256xf32>
    %472 = vector.extract_strided_slice %471 {offsets = [0, 0], sizes = [2, 64], strides = [1, 1]} : vector<2x256xf32> to vector<2x64xf32>
    %473 = arith.negf %472 : vector<2x64xf32>
    %474 = math.exp %473 : vector<2x64xf32>
    %cst_80 = arith.constant 1.000000e+00 : f32
    %475 = vector.broadcast %cst_80 : f32 to vector<2x64xf32>
    %476 = arith.addf %475, %474 : vector<2x64xf32>
    %477 = arith.divf %475, %476 : vector<2x64xf32>
    %478 = vector.extract_strided_slice %471 {offsets = [0, 64], sizes = [2, 64], strides = [1, 1]} : vector<2x256xf32> to vector<2x64xf32>
    %479 = arith.negf %478 : vector<2x64xf32>
    %480 = math.exp %479 : vector<2x64xf32>
    %cst_81 = arith.constant 1.000000e+00 : f32
    %481 = vector.broadcast %cst_81 : f32 to vector<2x64xf32>
    %482 = arith.addf %481, %480 : vector<2x64xf32>
    %483 = arith.divf %481, %482 : vector<2x64xf32>
    %484 = vector.extract_strided_slice %471 {offsets = [0, 128], sizes = [2, 64], strides = [1, 1]} : vector<2x256xf32> to vector<2x64xf32>
    %485 = math.tanh %484 : vector<2x64xf32>
    %486 = vector.extract_strided_slice %471 {offsets = [0, 192], sizes = [2, 64], strides = [1, 1]} : vector<2x256xf32> to vector<2x64xf32>
    %487 = arith.negf %486 : vector<2x64xf32>
    %488 = math.exp %487 : vector<2x64xf32>
    %cst_82 = arith.constant 1.000000e+00 : f32
    %489 = vector.broadcast %cst_82 : f32 to vector<2x64xf32>
    %490 = arith.addf %489, %488 : vector<2x64xf32>
    %491 = arith.divf %489, %490 : vector<2x64xf32>
    %492 = arith.mulf %483, %466 : vector<2x64xf32>
    %493 = arith.mulf %477, %485 : vector<2x64xf32>
    %494 = arith.addf %492, %493 : vector<2x64xf32>
    %495 = math.tanh %494 : vector<2x64xf32>
    %496 = arith.mulf %491, %495 : vector<2x64xf32>
    %c0_83 = arith.constant 0 : index
    %c0_84 = arith.constant 0 : index
    %497 = vector.load %arg9[%c0_83, %c0_84] : memref<64x1xf32, #tpu.memory_space<vmem>>, vector<64x1xf32>
    %cst_85 = arith.constant dense<0.000000e+00> : vector<2x1xf32>
    %498 = tpu.matmul %496, %497, %cst_85 {dimension_numbers = #tpu.dot_dimension_numbers<[1], [0], [0], [1], [0, 0, 1, 1], [], []>} : vector<2x64xf32>, vector<64x1xf32>, vector<2x1xf32> -> vector<2x1xf32>
    %c0_86 = arith.constant 0 : index
    %c0_87 = arith.constant 0 : index
    %499 = vector.load %arg10[%c0_86, %c0_87] : memref<1x1xf32, #tpu.memory_space<vmem>>, vector<1x1xf32>
    %500 = vector.broadcast %499 : vector<1x1xf32> to vector<2x1xf32>
    %501 = arith.addf %498, %500 : vector<2x1xf32>
    %502 = arith.negf %501 : vector<2x1xf32>
    %503 = math.exp %502 : vector<2x1xf32>
    %cst_88 = arith.constant 1.000000e+00 : f32
    %504 = vector.broadcast %cst_88 : f32 to vector<2x1xf32>
    %505 = arith.addf %504, %503 : vector<2x1xf32>
    %506 = arith.divf %504, %505 : vector<2x1xf32>
    %c0_89 = arith.constant 0 : index
    %c0_90 = arith.constant 0 : index
    %507 = vector.load %arg11[%c0_89, %c0_90] : memref<2x1xf32, #tpu.memory_space<vmem>>, vector<2x1xf32>
    tpu.vector_store %arg11[%c0_89, %c0_90], %506 {strides = array<i32>} : memref<2x1xf32, #tpu.memory_space<vmem>>, vector<2x1xf32>,
    return
  }
}

</mosaic_0001>

<llo_original>
// kernel: rnn_model_forward.1
$region0: #{rnn_model_forward.1}
  #allocation0 [shape = 'u32[]', space=smem, size = 0x4, offset = 0x4, fixed_abs, tag = 'smem constant byte address 0x4 - core index']
  #allocation1 [shape = 'u32[144,128]{1,0:T(1,128)}', space=vmem, size = 0x12000, scoped, tag = 'internal scratch']
  #allocation2 [shape = 'f32[1,1]{1,0:T(1,128)S(1)}', space=vmem, size = 0x200, scoped, tag = 'scoped memory for rnn_model_forward.1']
  %s0 = inlined_call_operand.vmem [shape: s32[16,1], index: 0, kind: input, shape index: {}]
  %s1 = inlined_call_operand.vmem [shape: s32[16,1], index: 1, kind: input, shape index: {}]
  %s2 = inlined_call_operand.vmem [shape: f32[5,256], index: 2, kind: input, shape index: {}]
  %s3 = inlined_call_operand.vmem [shape: f32[5,256], index: 3, kind: input, shape index: {}]
  %s4 = inlined_call_operand.vmem [shape: f32[64,256], index: 4, kind: input, shape index: {}]
  %s5 = inlined_call_operand.vmem [shape: f32[1,256], index: 5, kind: input, shape index: {}]
  %s6 = inlined_call_operand.hbm [shape: f32[128,256], index: 6, kind: input, shape index: {}]
  %s7 = inlined_call_operand.hbm [shape: f32[64,256], index: 7, kind: input, shape index: {}]
  %s8 = inlined_call_operand.hbm [shape: f32[1,256], index: 8, kind: input, shape index: {}]
  %s9 = inlined_call_operand.vmem [shape: f32[64,1], index: 9, kind: input, shape index: {}]
  %s10 = inlined_call_operand.<no memory space> [shape: f32[1,1], index: 10, kind: input, shape index: {}]
  %s11 = inlined_call_operand.vmem [shape: f32[2,1], index: 11, kind: output, shape index: {}]
  %s12 = sld [smem:[#allocation0]]
  $region66: #{rnn_model_forward.1} parent=0
    _
  %s14 = ssub.s32 1, %s12
  %s15 = scalar_select 0, %s14, %s12
  %v16 = vstv %s10
  %17 = vst [vmem:[#allocation2] sm:$0x1] %v16
  $region1: #{rnn_model_forward.1} parent=0
    #allocation3 [shape = 'u8[131072]{0}', space=vmem, size = 0x20000, scoped, tag = 'input window, operand 6, single buffered']
    #allocation4 [shape = 's32[1]{0}', space=sflag, size = 0x4, scoped, tag = 'scoped memory for rnn_model_forward.1']
    #allocation5 [shape = 'u8[65536]{0}', space=vmem, size = 0x10000, scoped, tag = 'input window, operand 7, single buffered']
    #allocation6 [shape = 's32[1]{0}', space=sflag, size = 0x4, scoped, tag = 'scoped memory for rnn_model_forward.1']
    #allocation7 [shape = 'u8[1024]{0}', space=vmem, size = 0x400, scoped, tag = 'input window, operand 8, single buffered']
    %18 = vsyncpa [#allocation4], 0
    %19 = vsyncpa [#allocation6], 0
    // Predicated region
    $region2: #{rnn_model_forward.1} parent=1 // pred_check
      _
    $region3: #{rnn_model_forward.1} parent=1 // pred_check_branch
      %21 = sbr.rel (0) target = $region5
    $region4: #{rnn_model_forward.1} parent=1 // pred_region
      _
    $region5: #{rnn_model_forward.1} parent=1 // pred_fallthru
      _
    // Predicated region
    $region6: #{rnn_model_forward.1} parent=1 // pred_check
      _
    $region7: #{rnn_model_forward.1} parent=1 // pred_check_branch
      %23 = sbr.rel (0) target = $region9
    $region8: #{rnn_model_forward.1} parent=1 // pred_region
      _
    $region9: #{rnn_model_forward.1} parent=1 // pred_fallthru
      _
    // Predicated region
    $region10: #{rnn_model_forward.1} parent=1 // pred_check
      _
    $region11: #{rnn_model_forward.1} parent=1 // pred_check_branch
      %25 = sbr.rel (0) target = $region13
    $region12: #{rnn_model_forward.1} parent=1 // pred_region
      _
    $region13: #{rnn_model_forward.1} parent=1 // pred_fallthru
      _
    // Predicated region
    $region14: #{rnn_model_forward.1} parent=1 // pred_check
      _
    $region15: #{rnn_model_forward.1} parent=1 // pred_check_branch
      %27 = sbr.rel (0) target = $region17
    $region16: #{rnn_model_forward.1} parent=1 // pred_region
      _
    $region17: #{rnn_model_forward.1} parent=1 // pred_fallthru
      _
    // Predicated region
    $region18: #{rnn_model_forward.1} parent=1 // pred_check
      _
    $region19: #{rnn_model_forward.1} parent=1 // pred_check_branch
      %29 = sbr.rel (0) target = $region21
    $region20: #{rnn_model_forward.1} parent=1 // pred_region
      _
    $region21: #{rnn_model_forward.1} parent=1 // pred_fallthru
      _
    // Predicated region
    $region22: #{rnn_model_forward.1} parent=1 // pred_check
      _
    $region23: #{rnn_model_forward.1} parent=1 // pred_check_branch
      %31 = sbr.rel (0) target = $region25
    $region24: #{rnn_model_forward.1} parent=1 // pred_region
      _
    $region25: #{rnn_model_forward.1} parent=1 // pred_fallthru
      _
    // Predicated region
    $region26: #{rnn_model_forward.1} parent=1 // pred_check
      _
    $region27: #{rnn_model_forward.1} parent=1 // pred_check_branch
      %33 = sbr.rel (0) target = $region29
    $region28: #{rnn_model_forward.1} parent=1 // pred_region
      %s35 = ssub.s32 4096, 4096
      %36 = vsyncadd [#allocation4], %s35
      %s37 = sshll.u32 [#allocation3], 4
      %s38 = int_to_ptr.vmem [resolvable:$true] %s37
      %43 = dma.hbm_to_vmem [thread:$0]  %s6, 4096, %s38, [#allocation4], 256, 256, 16
    $region29: #{rnn_model_forward.1} parent=1 // pred_fallthru
      _
    // Predicated region
    $region30: #{rnn_model_forward.1} parent=1 // pred_check
      _
    $region31: #{rnn_model_forward.1} parent=1 // pred_check_branch
      %45 = sbr.rel (0) target = $region33
    $region32: #{rnn_model_forward.1} parent=1 // pred_region
      %s47 = ssub.s32 2048, 2048
      %48 = vsyncadd [#allocation6], %s47
      %s49 = sshll.u32 [#allocation5], 4
      %s50 = int_to_ptr.vmem [resolvable:$true] %s49
      %55 = dma.hbm_to_vmem [thread:$0]  %s7, 2048, %s50, [#allocation6], 256, 256, 16
    $region33: #{rnn_model_forward.1} parent=1 // pred_fallthru
      _
    // Predicated region
    $region34: #{rnn_model_forward.1} parent=1 // pred_check
      _
    $region35: #{rnn_model_forward.1} parent=1 // pred_check_branch
      %57 = sbr.rel (0) target = $region37
    $region36: #{rnn_model_forward.1} parent=1 // pred_region
      %s59 = ssub.s32 32, 32
      %60 = vsyncadd [#allocation6], %s59
      %s62 = sshll.u32 [#allocation7], 4
      %s63 = int_to_ptr.vmem [resolvable:$true] %s62
      %65 = dma.hbm_to_vmem [thread:$0]  %s8, 32, %s63, [#allocation6]
    $region37: #{rnn_model_forward.1} parent=1 // pred_fallthru
      _
    // Predicated region
    $region38: #{rnn_model_forward.1} parent=1 // pred_check
      _
    $region39: #{rnn_model_forward.1} parent=1 // pred_check_branch
      %67 = sbr.rel (0) target = $region41
    $region40: #{rnn_model_forward.1} parent=1 // pred_region
      _
    $region41: #{rnn_model_forward.1} parent=1 // pred_fallthru
      _
    // Predicated region
    $region42: #{rnn_model_forward.1} parent=1 // pred_check
      _
    $region43: #{rnn_model_forward.1} parent=1 // pred_check_branch
      %69 = sbr.rel (0) target = $region45
    $region44: #{rnn_model_forward.1} parent=1 // pred_region
      _
    $region45: #{rnn_model_forward.1} parent=1 // pred_fallthru
      _
    // Predicated region
    $region46: #{rnn_model_forward.1} parent=1 // pred_check
      _
    $region47: #{rnn_model_forward.1} parent=1 // pred_check_branch
      %71 = sbr.rel (0) target = $region49
    $region48: #{rnn_model_forward.1} parent=1 // pred_region
      %72 = dma.done [#allocation4], 4096
    $region49: #{rnn_model_forward.1} parent=1 // pred_fallthru
      _
    // Predicated region
    $region50: #{rnn_model_forward.1} parent=1 // pred_check
      _
    $region51: #{rnn_model_forward.1} parent=1 // pred_check_branch
      %74 = sbr.rel (0) target = $region53
    $region52: #{rnn_model_forward.1} parent=1 // pred_region
      %75 = dma.done [#allocation6], 2048
    $region53: #{rnn_model_forward.1} parent=1 // pred_fallthru
      _
    // Predicated region
    $region54: #{rnn_model_forward.1} parent=1 // pred_check
      _
    $region55: #{rnn_model_forward.1} parent=1 // pred_check_branch
      %77 = sbr.rel (0) target = $region57
    $region56: #{rnn_model_forward.1} parent=1 // pred_region
      %78 = dma.done [#allocation6], 32
    $region57: #{rnn_model_forward.1} parent=1 // pred_fallthru
      _
    %v79 = vlaneseq
    %v80 = vand.u32 %v79, 127
    %v81 = vld [vmem:[%s0] sm:$0xff]
    %v82 = vld [vmem:[%s0 + $0x8] sm:$0xff]
    %83 = vset.pattern.permute.xlu0 0
    %84 = vperm.xlu0 %83, %v81
    %v85 = vpop.permute.xlu0 %84
    %86 = vset.pattern.permute.xlu0 0
    %87 = vperm.xlu0 %86, %v82
    %v88 = vpop.permute.xlu0 %87
    %vm89 = vcmp.eq.s32.totalorder %v85, %v80
    %vm90 = vcmp.eq.s32.totalorder %v88, %v80
    %v91 = vsel %vm89, 1, 0
    %v92 = vsel %vm90, 1, 0
    %v93 = vcvt.s32.f32 %v91
    %v94 = vcvt.s32.f32 %v92
    %v95 = vld [vmem:[%s1] sm:$0xff]
    %v96 = vld [vmem:[%s1 + $0x8] sm:$0xff]
    %97 = vset.pattern.permute.xlu0 0
    %98 = vperm.xlu0 %97, %v95
    %v99 = vpop.permute.xlu0 %98
    %100 = vset.pattern.permute.xlu0 0
    %101 = vperm.xlu0 %100, %v96
    %v102 = vpop.permute.xlu0 %101
    %vm103 = vcmp.eq.s32.totalorder %v99, %v80
    %vm104 = vcmp.eq.s32.totalorder %v102, %v80
    %v105 = vsel %vm103, 1, 0
    %v106 = vsel %vm104, 1, 0
    %v107 = vcvt.s32.f32 %v105
    %v108 = vcvt.s32.f32 %v106
    %v109 = vld [vmem:[%s2] sm:$0x1f]
    %v110 = vld [vmem:[%s2 + $0x8] sm:$0x1f]
    %v111 = vld [vmem:[%s3] sm:$0x1f]
    %v112 = vld [vmem:[%s3 + $0x8] sm:$0x1f]
    %vm113 = vcmask 39936
    %v115 = vsel %vm113, %v107, 0
    %v118 = vsel %vm113, %v108, 0
    %vm120 = vcmask 1044480
    %v122 = vsel %vm120, %v111, 0
    %v125 = vsel %vm120, %v112, 0
    %127 = vmatprep.subr.mxu0 %v125
    %128 = vmatpush1.msra.mxu0 %v122
    %129 = vmatprep.subr.mxu0 0.0
    %130 = vmatpush1.msra.mxu0 0.0
    %131 = vmatprep.subr.mxu0 0.0
    %132 = vmatpush1.msra.mxu0 0.0
    %133 = vmatprep.subr.mxu0 0.0
    %134 = vmatpush1.msra.mxu0 0.0
    %135 = vmatprep.subr.mxu0 0.0
    %136 = vmatpush1.msra.mxu0 0.0
    %137 = vmatprep.subr.mxu0 0.0
    %138 = vmatpush1.msra.mxu0 0.0
    %139 = vmatprep.subr.mxu0 0.0
    %140 = vmatpush1.msra.mxu0 0.0
    %141 = vmatprep.subr.mxu0 0.0
    %142 = vmatpush1.msra.mxu0 0.0
    %143 = vmatprep.subr.mxu0 0.0
    %144 = vmatpush1.msra.mxu0 0.0
    %145 = vmatprep.subr.mxu0 0.0
    %146 = vmatpush1.msra.mxu0 0.0
    %147 = vmatprep.subr.mxu0 0.0
    %148 = vmatpush1.msra.mxu0 0.0
    %149 = vmatprep.subr.mxu0 0.0
    %150 = vmatpush1.msra.mxu0 0.0
    %151 = vmatprep.subr.mxu0 0.0
    %152 = vmatpush1.msra.mxu0 0.0
    %153 = vmatprep.subr.mxu0 0.0
    %154 = vmatpush1.msra.mxu0 0.0
    %155 = vmatprep.subr.mxu0 0.0
    %156 = vmatpush1.msra.mxu0 0.0
    %157 = vmatprep.subr.mxu0 0.0
    %158 = vmatpush1.msra.mxu0 0.0
    %159 = vmatprep.subr.mxu0 0.0
    %160 = vmatpush1.msra.mxu0 0.0
    %161 = vmatprep.subr.mxu0 0.0
    %162 = vmatpush1.msra.mxu0 0.0
    %163 = vmatprep.subr.mxu0 0.0
    %164 = vmatpush1.msra.mxu0 0.0
    %165 = vmatprep.subr.mxu0 0.0
    %166 = vmatpush1.msra.mxu0 0.0
    %167 = vmatprep.subr.mxu0 0.0
    %168 = vmatpush1.msra.mxu0 0.0
    %169 = vmatprep.subr.mxu0 0.0
    %170 = vmatpush1.msra.mxu0 0.0
    %171 = vmatprep.subr.mxu0 0.0
    %172 = vmatpush1.msra.mxu0 0.0
    %173 = vmatprep.subr.mxu0 0.0
    %174 = vmatpush1.msra.mxu0 0.0
    %175 = vmatprep.subr.mxu0 0.0
    %176 = vmatpush1.msra.mxu0 0.0
    %177 = vmatprep.subr.mxu0 0.0
    %178 = vmatpush1.msra.mxu0 0.0
    %179 = vmatprep.subr.mxu0 0.0
    %180 = vmatpush1.msra.mxu0 0.0
    %181 = vmatprep.subr.mxu0 0.0
    %182 = vmatpush1.msra.mxu0 0.0
    %183 = vmatprep.subr.mxu0 0.0
    %184 = vmatpush1.msra.mxu0 0.0
    %185 = vmatprep.subr.mxu0 0.0
    %186 = vmatpush1.msra.mxu0 0.0
    %187 = vmatprep.subr.mxu0 0.0
    %188 = vmatpush1.msra.mxu0 0.0
    %189 = vmatprep.subr.mxu0 0.0
    %190 = vmatpush1.msra.mxu0 0.0
    %191 = vmatprep.mubr.f32.mxu0 0.0
    %192 = vmatmul.mubr.f32.gmra.mrb[0].mxu0 %v115
    %v193 = vpop.f32.mrb[0].mxu0
    %v194 = vadd.f32 0.0, %v193
    %v195 = vpop.f32.mrb[0].mxu0
    %v196 = vadd.f32 0.0, %v195
    %197 = vmatprep.mubr.f32.mxu0 0.0
    %198 = vmatmul.mubr.f32.gmra.mrb[0].mxu0 %v118
    %v199 = vpop.f32.mrb[0].mxu0
    %v200 = vadd.f32 0.0, %v199
    %v201 = vpop.f32.mrb[0].mxu0
    %v202 = vadd.f32 0.0, %v201
    %203 = vdwg.mxu0
    %v205 = vsel %vm113, %v93, 0
    %v208 = vsel %vm113, %v94, 0
    %v211 = vsel %vm120, %v109, 0
    %v214 = vsel %vm120, %v110, 0
    %216 = vmatprep.subr.mxu0 %v214
    %217 = vmatpush1.msra.mxu0 %v211
    %218 = vmatprep.subr.mxu0 0.0
    %219 = vmatpush1.msra.mxu0 0.0
    %220 = vmatprep.subr.mxu0 0.0
    %221 = vmatpush1.msra.mxu0 0.0
    %222 = vmatprep.subr.mxu0 0.0
    %223 = vmatpush1.msra.mxu0 0.0
    %224 = vmatprep.subr.mxu0 0.0
    %225 = vmatpush1.msra.mxu0 0.0
    %226 = vmatprep.subr.mxu0 0.0
    %227 = vmatpush1.msra.mxu0 0.0
    %228 = vmatprep.subr.mxu0 0.0
    %229 = vmatpush1.msra.mxu0 0.0
    %230 = vmatprep.subr.mxu0 0.0
    %231 = vmatpush1.msra.mxu0 0.0
    %232 = vmatprep.subr.mxu0 0.0
    %233 = vmatpush1.msra.mxu0 0.0
    %234 = vmatprep.subr.mxu0 0.0
    %235 = vmatpush1.msra.mxu0 0.0
    %236 = vmatprep.subr.mxu0 0.0
    %237 = vmatpush1.msra.mxu0 0.0
    %238 = vmatprep.subr.mxu0 0.0
    %239 = vmatpush1.msra.mxu0 0.0
    %240 = vmatprep.subr.mxu0 0.0
    %241 = vmatpush1.msra.mxu0 0.0
    %242 = vmatprep.subr.mxu0 0.0
    %243 = vmatpush1.msra.mxu0 0.0
    %244 = vmatprep.subr.mxu0 0.0
    %245 = vmatpush1.msra.mxu0 0.0
    %246 = vmatprep.subr.mxu0 0.0
    %247 = vmatpush1.msra.mxu0 0.0
    %248 = vmatprep.subr.mxu0 0.0
    %249 = vmatpush1.msra.mxu0 0.0
    %250 = vmatprep.subr.mxu0 0.0
    %251 = vmatpush1.msra.mxu0 0.0
    %252 = vmatprep.subr.mxu0 0.0
    %253 = vmatpush1.msra.mxu0 0.0
    %254 = vmatprep.subr.mxu0 0.0
    %255 = vmatpush1.msra.mxu0 0.0
    %256 = vmatprep.subr.mxu0 0.0
    %257 = vmatpush1.msra.mxu0 0.0
    %258 = vmatprep.subr.mxu0 0.0
    %259 = vmatpush1.msra.mxu0 0.0
    %260 = vmatprep.subr.mxu0 0.0
    %261 = vmatpush1.msra.mxu0 0.0
    %262 = vmatprep.subr.mxu0 0.0
    %263 = vmatpush1.msra.mxu0 0.0
    %264 = vmatprep.subr.mxu0 0.0
    %265 = vmatpush1.msra.mxu0 0.0
    %266 = vmatprep.subr.mxu0 0.0
    %267 = vmatpush1.msra.mxu0 0.0
    %268 = vmatprep.subr.mxu0 0.0
    %269 = vmatpush1.msra.mxu0 0.0
    %270 = vmatprep.subr.mxu0 0.0
    %271 = vmatpush1.msra.mxu0 0.0
    %272 = vmatprep.subr.mxu0 0.0
    %273 = vmatpush1.msra.mxu0 0.0
    %274 = vmatprep.subr.mxu0 0.0
    %275 = vmatpush1.msra.mxu0 0.0
    %276 = vmatprep.subr.mxu0 0.0
    %277 = vmatpush1.msra.mxu0 0.0
    %278 = vmatprep.subr.mxu0 0.0
    %279 = vmatpush1.msra.mxu0 0.0
    %280 = vmatprep.mubr.f32.mxu0 0.0
    %281 = vmatmul.mubr.f32.gmra.mrb[0].mxu0 %v205
    %v282 = vpop.f32.mrb[0].mxu0
    %v283 = vadd.f32 %v194, %v282
    %v284 = vpop.f32.mrb[0].mxu0
    %v285 = vadd.f32 %v196, %v284
    %286 = vmatprep.mubr.f32.mxu0 0.0
    %287 = vmatmul.mubr.f32.gmra.mrb[0].mxu0 %v208
    %v288 = vpop.f32.mrb[0].mxu0
    %v289 = vadd.f32 %v200, %v288
    %v290 = vpop.f32.mrb[0].mxu0
    %v291 = vadd.f32 %v202, %v290
    %292 = vdwg.mxu0
    %v293 = vld [vmem:[%s5] sm:$0x3]
    %v295 = vlaneseq
    %v296 = vshrl.u32 %v295, 7
    %v297 = vsub.s32 0, %v296
    %v298 = vrot.slane %v293, %v297
    %v299 = vlaneseq
    %v300 = vshrl.u32 %v299, 7
    %v301 = vsub.s32 1, %v300
    %v302 = vrot.slane %v293, %v301
    %v305 = vadd.f32 %v283, %v298
    %v306 = vadd.f32 %v285, %v302
    %v307 = vadd.f32 %v289, %v298
    %v308 = vadd.f32 %v291, %v302
    %v309 = vld [vmem:[%s4] sm:$0xff]
    %v310 = vld [vmem:[%s4 + $0x8] sm:$0xff]
    %v311 = vld [vmem:[%s4 + $0x10] sm:$0xff]
    %v312 = vld [vmem:[%s4 + $0x18] sm:$0xff]
    %v313 = vld [vmem:[%s4 + $0x20] sm:$0xff]
    %v314 = vld [vmem:[%s4 + $0x28] sm:$0xff]
    %v315 = vld [vmem:[%s4 + $0x30] sm:$0xff]
    %v316 = vld [vmem:[%s4 + $0x38] sm:$0xff]
    %v317 = vld [vmem:[%s4 + $0x40] sm:$0xff]
    %v318 = vld [vmem:[%s4 + $0x48] sm:$0xff]
    %v319 = vld [vmem:[%s4 + $0x50] sm:$0xff]
    %v320 = vld [vmem:[%s4 + $0x58] sm:$0xff]
    %v321 = vld [vmem:[%s4 + $0x60] sm:$0xff]
    %v322 = vld [vmem:[%s4 + $0x68] sm:$0xff]
    %v323 = vld [vmem:[%s4 + $0x70] sm:$0xff]
    %v324 = vld [vmem:[%s4 + $0x78] sm:$0xff]
    %v325 = vxor.u32 %v305, 2147483648
    %v326 = vmul.f32 %v325, 1.442695
    %v327 = vpow.pop %v326
    %v328 = vadd.f32 %v327, 1.0
    %v329 = vrcp.pop %v328
    %v330 = vmul.f32 1.0, %v329
    %v331 = vtanh.pop %v306
    %v332 = vxor.u32 %v306, 2147483648
    %v333 = vmul.f32 %v332, 1.442695
    %v334 = vpow.pop %v333
    %v335 = vadd.f32 %v334, 1.0
    %v336 = vrcp.pop %v335
    %v337 = vmul.f32 1.0, %v336
    %v338 = vmul.f32 %v330, 0.0
    %v339 = vmul.f32 %v330, %v331
    %341 = vrot.lane.b32.xlu0 %v339, 64
    %v342 = vpop.permute.xlu0 %341
    %v344 = vadd.f32 %v338, %v342
    %v345 = vtanh.pop %v344
    %v346 = vmul.f32 %v337, %v345
    %348 = vrot.lane.b32.xlu0 %v346, 64
    %v349 = vpop.permute.xlu0 %348
    %vm350 = vcmask 523264
    %v351 = vsel %vm350, %v349, 0
    %353 = vmatprep.subr.mxu0 %v310
    %354 = vmatpush1.msra.mxu0 %v309
    %355 = vmatprep.subr.mxu0 %v312
    %356 = vmatpush1.msra.mxu0 %v311
    %357 = vmatprep.subr.mxu0 %v314
    %358 = vmatpush1.msra.mxu0 %v313
    %359 = vmatprep.subr.mxu0 %v316
    %360 = vmatpush1.msra.mxu0 %v315
    %361 = vmatprep.subr.mxu0 %v318
    %362 = vmatpush1.msra.mxu0 %v317
    %363 = vmatprep.subr.mxu0 %v320
    %364 = vmatpush1.msra.mxu0 %v319
    %365 = vmatprep.subr.mxu0 %v322
    %366 = vmatpush1.msra.mxu0 %v321
    %367 = vmatprep.subr.mxu0 %v324
    %368 = vmatpush1.msra.mxu0 %v323
    %369 = vmatprep.subr.mxu0 0.0
    %370 = vmatpush1.msra.mxu0 0.0
    %371 = vmatprep.subr.mxu0 0.0
    %372 = vmatpush1.msra.mxu0 0.0
    %373 = vmatprep.subr.mxu0 0.0
    %374 = vmatpush1.msra.mxu0 0.0
    %375 = vmatprep.subr.mxu0 0.0
    %376 = vmatpush1.msra.mxu0 0.0
    %377 = vmatprep.subr.mxu0 0.0
    %378 = vmatpush1.msra.mxu0 0.0
    %379 = vmatprep.subr.mxu0 0.0
    %380 = vmatpush1.msra.mxu0 0.0
    %381 = vmatprep.subr.mxu0 0.0
    %382 = vmatpush1.msra.mxu0 0.0
    %383 = vmatprep.subr.mxu0 0.0
    %384 = vmatpush1.msra.mxu0 0.0
    %385 = vmatprep.subr.mxu0 0.0
    %386 = vmatpush1.msra.mxu0 0.0
    %387 = vmatprep.subr.mxu0 0.0
    %388 = vmatpush1.msra.mxu0 0.0
    %389 = vmatprep.subr.mxu0 0.0
    %390 = vmatpush1.msra.mxu0 0.0
    %391 = vmatprep.subr.mxu0 0.0
    %392 = vmatpush1.msra.mxu0 0.0
    %393 = vmatprep.subr.mxu0 0.0
    %394 = vmatpush1.msra.mxu0 0.0
    %395 = vmatprep.subr.mxu0 0.0
    %396 = vmatpush1.msra.mxu0 0.0
    %397 = vmatprep.subr.mxu0 0.0
    %398 = vmatpush1.msra.mxu0 0.0
    %399 = vmatprep.subr.mxu0 0.0
    %400 = vmatpush1.msra.mxu0 0.0
    %401 = vmatprep.subr.mxu0 0.0
    %402 = vmatpush1.msra.mxu0 0.0
    %403 = vmatprep.subr.mxu0 0.0
    %404 = vmatpush1.msra.mxu0 0.0
    %405 = vmatprep.subr.mxu0 0.0
    %406 = vmatpush1.msra.mxu0 0.0
    %407 = vmatprep.subr.mxu0 0.0
    %408 = vmatpush1.msra.mxu0 0.0
    %409 = vmatprep.subr.mxu0 0.0
    %410 = vmatpush1.msra.mxu0 0.0
    %411 = vmatprep.subr.mxu0 0.0
    %412 = vmatpush1.msra.mxu0 0.0
    %413 = vmatprep.subr.mxu0 0.0
    %414 = vmatpush1.msra.mxu0 0.0
    %415 = vmatprep.subr.mxu0 0.0
    %416 = vmatpush1.msra.mxu0 0.0
    %417 = vmatprep.mubr.f32.mxu0 0.0
    %418 = vmatmul.mubr.f32.gmra.mrb[0].mxu0 %v351
    %v419 = vpop.f32.mrb[0].mxu0
    %v420 = vadd.f32 0.0, %v419
    %v421 = vpop.f32.mrb[0].mxu0
    %v422 = vadd.f32 0.0, %v421
    %423 = vdwg.mxu0
    %v426 = vrot.slane %v420, 6
    %v427 = vrot.slane %v422, 6
    %v430 = vadd.f32 %v305, %v426
    %v431 = vadd.f32 %v306, %v427
    %v432 = vxor.u32 %v430, 2147483648
    %v433 = vmul.f32 %v432, 1.442695
    %v434 = vpow.pop %v433
    %v435 = vadd.f32 %v434, 1.0
    %v436 = vrcp.pop %v435
    %v437 = vmul.f32 1.0, %v436
    %v438 = vtanh.pop %v431
    %v439 = vxor.u32 %v431, 2147483648
    %v440 = vmul.f32 %v439, 1.442695
    %v441 = vpow.pop %v440
    %v442 = vadd.f32 %v441, 1.0
    %v443 = vrcp.pop %v442
    %v444 = vmul.f32 1.0, %v443
    %v446 = vrot.slane %v344, 6
    %v448 = vmul.f32 %v437, %v446
    %v449 = vmul.f32 %v437, %v438
    %451 = vrot.lane.b32.xlu0 %v449, 64
    %v452 = vpop.permute.xlu0 %451
    %v454 = vadd.f32 %v448, %v452
    %v455 = vtanh.pop %v454
    %v456 = vmul.f32 %v444, %v455
    %v458 = vrot.slane %v456, 2
    %459 = vrot.lane.b32.xlu0 %v458, 64
    %v460 = vpop.permute.xlu0 %459
    %v461 = vsel %vm350, %v460, 0
    %463 = vmatprep.subr.mxu0 %v310
    %464 = vmatpush1.msra.mxu0 %v309
    %465 = vmatprep.subr.mxu0 %v312
    %466 = vmatpush1.msra.mxu0 %v311
    %467 = vmatprep.subr.mxu0 %v314
    %468 = vmatpush1.msra.mxu0 %v313
    %469 = vmatprep.subr.mxu0 %v316
    %470 = vmatpush1.msra.mxu0 %v315
    %471 = vmatprep.subr.mxu0 %v318
    %472 = vmatpush1.msra.mxu0 %v317
    %473 = vmatprep.subr.mxu0 %v320
    %474 = vmatpush1.msra.mxu0 %v319
    %475 = vmatprep.subr.mxu0 %v322
    %476 = vmatpush1.msra.mxu0 %v321
    %477 = vmatprep.subr.mxu0 %v324
    %478 = vmatpush1.msra.mxu0 %v323
    %479 = vmatprep.subr.mxu0 0.0
    %480 = vmatpush1.msra.mxu0 0.0
    %481 = vmatprep.subr.mxu0 0.0
    %482 = vmatpush1.msra.mxu0 0.0
    %483 = vmatprep.subr.mxu0 0.0
    %484 = vmatpush1.msra.mxu0 0.0
    %485 = vmatprep.subr.mxu0 0.0
    %486 = vmatpush1.msra.mxu0 0.0
    %487 = vmatprep.subr.mxu0 0.0
    %488 = vmatpush1.msra.mxu0 0.0
    %489 = vmatprep.subr.mxu0 0.0
    %490 = vmatpush1.msra.mxu0 0.0
    %491 = vmatprep.subr.mxu0 0.0
    %492 = vmatpush1.msra.mxu0 0.0
    %493 = vmatprep.subr.mxu0 0.0
    %494 = vmatpush1.msra.mxu0 0.0
    %495 = vmatprep.subr.mxu0 0.0
    %496 = vmatpush1.msra.mxu0 0.0
    %497 = vmatprep.subr.mxu0 0.0
    %498 = vmatpush1.msra.mxu0 0.0
    %499 = vmatprep.subr.mxu0 0.0
    %500 = vmatpush1.msra.mxu0 0.0
    %501 = vmatprep.subr.mxu0 0.0
    %502 = vmatpush1.msra.mxu0 0.0
    %503 = vmatprep.subr.mxu0 0.0
    %504 = vmatpush1.msra.mxu0 0.0
    %505 = vmatprep.subr.mxu0 0.0
    %506 = vmatpush1.msra.mxu0 0.0
    %507 = vmatprep.subr.mxu0 0.0
    %508 = vmatpush1.msra.mxu0 0.0
    %509 = vmatprep.subr.mxu0 0.0
    %510 = vmatpush1.msra.mxu0 0.0
    %511 = vmatprep.subr.mxu0 0.0
    %512 = vmatpush1.msra.mxu0 0.0
    %513 = vmatprep.subr.mxu0 0.0
    %514 = vmatpush1.msra.mxu0 0.0
    %515 = vmatprep.subr.mxu0 0.0
    %516 = vmatpush1.msra.mxu0 0.0
    %517 = vmatprep.subr.mxu0 0.0
    %518 = vmatpush1.msra.mxu0 0.0
    %519 = vmatprep.subr.mxu0 0.0
    %520 = vmatpush1.msra.mxu0 0.0
    %521 = vmatprep.subr.mxu0 0.0
    %522 = vmatpush1.msra.mxu0 0.0
    %523 = vmatprep.subr.mxu0 0.0
    %524 = vmatpush1.msra.mxu0 0.0
    %525 = vmatprep.subr.mxu0 0.0
    %526 = vmatpush1.msra.mxu0 0.0
    %527 = vmatprep.mubr.f32.mxu0 0.0
    %528 = vmatmul.mubr.f32.gmra.mrb[0].mxu0 %v461
    %v529 = vpop.f32.mrb[0].mxu0
    %v530 = vadd.f32 0.0, %v529
    %v531 = vpop.f32.mrb[0].mxu0
    %v532 = vadd.f32 0.0, %v531
    %533 = vdwg.mxu0
    %v536 = vrot.slane %v530, 4
    %v537 = vrot.slane %v532, 4
    %v540 = vadd.f32 %v305, %v536
    %v541 = vadd.f32 %v306, %v537
    %v542 = vxor.u32 %v540, 2147483648
    %v543 = vmul.f32 %v542, 1.442695
    %v544 = vpow.pop %v543
    %v545 = vadd.f32 %v544, 1.0
    %v546 = vrcp.pop %v545
    %v547 = vmul.f32 1.0, %v546
    %v548 = vtanh.pop %v541
    %v549 = vxor.u32 %v541, 2147483648
    %v550 = vmul.f32 %v549, 1.442695
    %v551 = vpow.pop %v550
    %v552 = vadd.f32 %v551, 1.0
    %v553 = vrcp.pop %v552
    %v554 = vmul.f32 1.0, %v553
    %v556 = vrot.slane %v454, 6
    %v558 = vmul.f32 %v547, %v556
    %v559 = vmul.f32 %v547, %v548
    %561 = vrot.lane.b32.xlu0 %v559, 64
    %v562 = vpop.permute.xlu0 %561
    %v564 = vadd.f32 %v558, %v562
    %v565 = vtanh.pop %v564
    %v566 = vmul.f32 %v554, %v565
    %v568 = vrot.slane %v566, 4
    %569 = vrot.lane.b32.xlu0 %v568, 64
    %v570 = vpop.permute.xlu0 %569
    %v571 = vsel %vm350, %v570, 0
    %573 = vmatprep.subr.mxu0 %v310
    %574 = vmatpush1.msra.mxu0 %v309
    %575 = vmatprep.subr.mxu0 %v312
    %576 = vmatpush1.msra.mxu0 %v311
    %577 = vmatprep.subr.mxu0 %v314
    %578 = vmatpush1.msra.mxu0 %v313
    %579 = vmatprep.subr.mxu0 %v316
    %580 = vmatpush1.msra.mxu0 %v315
    %581 = vmatprep.subr.mxu0 %v318
    %582 = vmatpush1.msra.mxu0 %v317
    %583 = vmatprep.subr.mxu0 %v320
    %584 = vmatpush1.msra.mxu0 %v319
    %585 = vmatprep.subr.mxu0 %v322
    %586 = vmatpush1.msra.mxu0 %v321
    %587 = vmatprep.subr.mxu0 %v324
    %588 = vmatpush1.msra.mxu0 %v323
    %589 = vmatprep.subr.mxu0 0.0
    %590 = vmatpush1.msra.mxu0 0.0
    %591 = vmatprep.subr.mxu0 0.0
    %592 = vmatpush1.msra.mxu0 0.0
    %593 = vmatprep.subr.mxu0 0.0
    %594 = vmatpush1.msra.mxu0 0.0
    %595 = vmatprep.subr.mxu0 0.0
    %596 = vmatpush1.msra.mxu0 0.0
    %597 = vmatprep.subr.mxu0 0.0
    %598 = vmatpush1.msra.mxu0 0.0
    %599 = vmatprep.subr.mxu0 0.0
    %600 = vmatpush1.msra.mxu0 0.0
    %601 = vmatprep.subr.mxu0 0.0
    %602 = vmatpush1.msra.mxu0 0.0
    %603 = vmatprep.subr.mxu0 0.0
    %604 = vmatpush1.msra.mxu0 0.0
    %605 = vmatprep.subr.mxu0 0.0
    %606 = vmatpush1.msra.mxu0 0.0
    %607 = vmatprep.subr.mxu0 0.0
    %608 = vmatpush1.msra.mxu0 0.0
    %609 = vmatprep.subr.mxu0 0.0
    %610 = vmatpush1.msra.mxu0 0.0
    %611 = vmatprep.subr.mxu0 0.0
    %612 = vmatpush1.msra.mxu0 0.0
    %613 = vmatprep.subr.mxu0 0.0
    %614 = vmatpush1.msra.mxu0 0.0
    %615 = vmatprep.subr.mxu0 0.0
    %616 = vmatpush1.msra.mxu0 0.0
    %617 = vmatprep.subr.mxu0 0.0
    %618 = vmatpush1.msra.mxu0 0.0
    %619 = vmatprep.subr.mxu0 0.0
    %620 = vmatpush1.msra.mxu0 0.0
    %621 = vmatprep.subr.mxu0 0.0
    %622 = vmatpush1.msra.mxu0 0.0
    %623 = vmatprep.subr.mxu0 0.0
    %624 = vmatpush1.msra.mxu0 0.0
    %625 = vmatprep.subr.mxu0 0.0
    %626 = vmatpush1.msra.mxu0 0.0
    %627 = vmatprep.subr.mxu0 0.0
    %628 = vmatpush1.msra.mxu0 0.0
    %629 = vmatprep.subr.mxu0 0.0
    %630 = vmatpush1.msra.mxu0 0.0
    %631 = vmatprep.subr.mxu0 0.0
    %632 = vmatpush1.msra.mxu0 0.0
    %633 = vmatprep.subr.mxu0 0.0
    %634 = vmatpush1.msra.mxu0 0.0
    %635 = vmatprep.subr.mxu0 0.0
    %636 = vmatpush1.msra.mxu0 0.0
    %637 = vmatprep.mubr.f32.mxu0 0.0
    %638 = vmatmul.mubr.f32.gmra.mrb[0].mxu0 %v571
    %v639 = vpop.f32.mrb[0].mxu0
    %v640 = vadd.f32 0.0, %v639
    %v641 = vpop.f32.mrb[0].mxu0
    %v642 = vadd.f32 0.0, %v641
    %643 = vdwg.mxu0
    %v646 = vrot.slane %v640, 2
    %v647 = vrot.slane %v642, 2
    %v650 = vadd.f32 %v305, %v646
    %v651 = vadd.f32 %v306, %v647
    %v652 = vxor.u32 %v650, 2147483648
    %v653 = vmul.f32 %v652, 1.442695
    %v654 = vpow.pop %v653
    %v655 = vadd.f32 %v654, 1.0
    %v656 = vrcp.pop %v655
    %v657 = vmul.f32 1.0, %v656
    %v658 = vtanh.pop %v651
    %v659 = vxor.u32 %v651, 2147483648
    %v660 = vmul.f32 %v659, 1.442695
    %v661 = vpow.pop %v660
    %v662 = vadd.f32 %v661, 1.0
    %v663 = vrcp.pop %v662
    %v664 = vmul.f32 1.0, %v663
    %v666 = vrot.slane %v564, 6
    %v668 = vmul.f32 %v657, %v666
    %v669 = vmul.f32 %v657, %v658
    %671 = vrot.lane.b32.xlu0 %v669, 64
    %v672 = vpop.permute.xlu0 %671
    %v674 = vadd.f32 %v668, %v672
    %v675 = vtanh.pop %v674
    %v676 = vmul.f32 %v664, %v675
    %v678 = vrot.slane %v676, 6
    %679 = vrot.lane.b32.xlu0 %v678, 64
    %v680 = vpop.permute.xlu0 %679
    %v681 = vsel %vm350, %v680, 0
    %683 = vmatprep.subr.mxu0 %v310
    %684 = vmatpush1.msra.mxu0 %v309
    %685 = vmatprep.subr.mxu0 %v312
    %686 = vmatpush1.msra.mxu0 %v311
    %687 = vmatprep.subr.mxu0 %v314
    %688 = vmatpush1.msra.mxu0 %v313
    %689 = vmatprep.subr.mxu0 %v316
    %690 = vmatpush1.msra.mxu0 %v315
    %691 = vmatprep.subr.mxu0 %v318
    %692 = vmatpush1.msra.mxu0 %v317
    %693 = vmatprep.subr.mxu0 %v320
    %694 = vmatpush1.msra.mxu0 %v319
    %695 = vmatprep.subr.mxu0 %v322
    %696 = vmatpush1.msra.mxu0 %v321
    %697 = vmatprep.subr.mxu0 %v324
    %698 = vmatpush1.msra.mxu0 %v323
    %699 = vmatprep.subr.mxu0 0.0
    %700 = vmatpush1.msra.mxu0 0.0
    %701 = vmatprep.subr.mxu0 0.0
    %702 = vmatpush1.msra.mxu0 0.0
    %703 = vmatprep.subr.mxu0 0.0
    %704 = vmatpush1.msra.mxu0 0.0
    %705 = vmatprep.subr.mxu0 0.0
    %706 = vmatpush1.msra.mxu0 0.0
    %707 = vmatprep.subr.mxu0 0.0
    %708 = vmatpush1.msra.mxu0 0.0
    %709 = vmatprep.subr.mxu0 0.0
    %710 = vmatpush1.msra.mxu0 0.0
    %711 = vmatprep.subr.mxu0 0.0
    %712 = vmatpush1.msra.mxu0 0.0
    %713 = vmatprep.subr.mxu0 0.0
    %714 = vmatpush1.msra.mxu0 0.0
    %715 = vmatprep.subr.mxu0 0.0
    %716 = vmatpush1.msra.mxu0 0.0
    %717 = vmatprep.subr.mxu0 0.0
    %718 = vmatpush1.msra.mxu0 0.0
    %719 = vmatprep.subr.mxu0 0.0
    %720 = vmatpush1.msra.mxu0 0.0
    %721 = vmatprep.subr.mxu0 0.0
    %722 = vmatpush1.msra.mxu0 0.0
    %723 = vmatprep.subr.mxu0 0.0
    %724 = vmatpush1.msra.mxu0 0.0
    %725 = vmatprep.subr.mxu0 0.0
    %726 = vmatpush1.msra.mxu0 0.0
    %727 = vmatprep.subr.mxu0 0.0
    %728 = vmatpush1.msra.mxu0 0.0
    %729 = vmatprep.subr.mxu0 0.0
    %730 = vmatpush1.msra.mxu0 0.0
    %731 = vmatprep.subr.mxu0 0.0
    %732 = vmatpush1.msra.mxu0 0.0
    %733 = vmatprep.subr.mxu0 0.0
    %734 = vmatpush1.msra.mxu0 0.0
    %735 = vmatprep.subr.mxu0 0.0
    %736 = vmatpush1.msra.mxu0 0.0
    %737 = vmatprep.subr.mxu0 0.0
    %738 = vmatpush1.msra.mxu0 0.0
    %739 = vmatprep.subr.mxu0 0.0
    %740 = vmatpush1.msra.mxu0 0.0
    %741 = vmatprep.subr.mxu0 0.0
    %742 = vmatpush1.msra.mxu0 0.0
    %743 = vmatprep.subr.mxu0 0.0
    %744 = vmatpush1.msra.mxu0 0.0
    %745 = vmatprep.subr.mxu0 0.0
    %746 = vmatpush1.msra.mxu0 0.0
    %747 = vmatprep.mubr.f32.mxu0 0.0
    %748 = vmatmul.mubr.f32.gmra.mrb[0].mxu0 %v681
    %v749 = vpop.f32.mrb[0].mxu0
    %v750 = vadd.f32 0.0, %v749
    %v751 = vpop.f32.mrb[0].mxu0
    %v752 = vadd.f32 0.0, %v751
    %753 = vdwg.mxu0
    %v754 = vadd.f32 %v307, %v750
    %v755 = vadd.f32 %v308, %v752
    %v756 = vxor.u32 %v754, 2147483648
    %v757 = vmul.f32 %v756, 1.442695
    %v758 = vpow.pop %v757
    %v759 = vadd.f32 %v758, 1.0
    %v760 = vrcp.pop %v759
    %v761 = vmul.f32 1.0, %v760
    %v762 = vtanh.pop %v755
    %v763 = vxor.u32 %v755, 2147483648
    %v764 = vmul.f32 %v763, 1.442695
    %v765 = vpow.pop %v764
    %v766 = vadd.f32 %v765, 1.0
    %v767 = vrcp.pop %v766
    %v768 = vmul.f32 1.0, %v767
    %v770 = vrot.slane %v674, 6
    %v772 = vmul.f32 %v761, %v770
    %v773 = vmul.f32 %v761, %v762
    %775 = vrot.lane.b32.xlu0 %v773, 64
    %v776 = vpop.permute.xlu0 %775
    %v778 = vadd.f32 %v772, %v776
    %v779 = vtanh.pop %v778
    %v780 = vmul.f32 %v768, %v779
    %782 = vrot.lane.b32.xlu0 %v780, 64
    %v783 = vpop.permute.xlu0 %782
    %v784 = vsel %vm350, %v783, 0
    %786 = vmatprep.subr.mxu0 %v310
    %787 = vmatpush1.msra.mxu0 %v309
    %788 = vmatprep.subr.mxu0 %v312
    %789 = vmatpush1.msra.mxu0 %v311
    %790 = vmatprep.subr.mxu0 %v314
    %791 = vmatpush1.msra.mxu0 %v313
    %792 = vmatprep.subr.mxu0 %v316
    %793 = vmatpush1.msra.mxu0 %v315
    %794 = vmatprep.subr.mxu0 %v318
    %795 = vmatpush1.msra.mxu0 %v317
    %796 = vmatprep.subr.mxu0 %v320
    %797 = vmatpush1.msra.mxu0 %v319
    %798 = vmatprep.subr.mxu0 %v322
    %799 = vmatpush1.msra.mxu0 %v321
    %800 = vmatprep.subr.mxu0 %v324
    %801 = vmatpush1.msra.mxu0 %v323
    %802 = vmatprep.subr.mxu0 0.0
    %803 = vmatpush1.msra.mxu0 0.0
    %804 = vmatprep.subr.mxu0 0.0
    %805 = vmatpush1.msra.mxu0 0.0
    %806 = vmatprep.subr.mxu0 0.0
    %807 = vmatpush1.msra.mxu0 0.0
    %808 = vmatprep.subr.mxu0 0.0
    %809 = vmatpush1.msra.mxu0 0.0
    %810 = vmatprep.subr.mxu0 0.0
    %811 = vmatpush1.msra.mxu0 0.0
    %812 = vmatprep.subr.mxu0 0.0
    %813 = vmatpush1.msra.mxu0 0.0
    %814 = vmatprep.subr.mxu0 0.0
    %815 = vmatpush1.msra.mxu0 0.0
    %816 = vmatprep.subr.mxu0 0.0
    %817 = vmatpush1.msra.mxu0 0.0
    %818 = vmatprep.subr.mxu0 0.0
    %819 = vmatpush1.msra.mxu0 0.0
    %820 = vmatprep.subr.mxu0 0.0
    %821 = vmatpush1.msra.mxu0 0.0
    %822 = vmatprep.subr.mxu0 0.0
    %823 = vmatpush1.msra.mxu0 0.0
    %824 = vmatprep.subr.mxu0 0.0
    %825 = vmatpush1.msra.mxu0 0.0
    %826 = vmatprep.subr.mxu0 0.0
    %827 = vmatpush1.msra.mxu0 0.0
    %828 = vmatprep.subr.mxu0 0.0
    %829 = vmatpush1.msra.mxu0 0.0
    %830 = vmatprep.subr.mxu0 0.0
    %831 = vmatpush1.msra.mxu0 0.0
    %832 = vmatprep.subr.mxu0 0.0
    %833 = vmatpush1.msra.mxu0 0.0
    %834 = vmatprep.subr.mxu0 0.0
    %835 = vmatpush1.msra.mxu0 0.0
    %836 = vmatprep.subr.mxu0 0.0
    %837 = vmatpush1.msra.mxu0 0.0
    %838 = vmatprep.subr.mxu0 0.0
    %839 = vmatpush1.msra.mxu0 0.0
    %840 = vmatprep.subr.mxu0 0.0
    %841 = vmatpush1.msra.mxu0 0.0
    %842 = vmatprep.subr.mxu0 0.0
    %843 = vmatpush1.msra.mxu0 0.0
    %844 = vmatprep.subr.mxu0 0.0
    %845 = vmatpush1.msra.mxu0 0.0
    %846 = vmatprep.subr.mxu0 0.0
    %847 = vmatpush1.msra.mxu0 0.0
    %848 = vmatprep.subr.mxu0 0.0
    %849 = vmatpush1.msra.mxu0 0.0
    %850 = vmatprep.mubr.f32.mxu0 0.0
    %851 = vmatmul.mubr.f32.gmra.mrb[0].mxu0 %v784
    %v852 = vpop.f32.mrb[0].mxu0
    %v853 = vadd.f32 0.0, %v852
    %v854 = vpop.f32.mrb[0].mxu0
    %v855 = vadd.f32 0.0, %v854
    %856 = vdwg.mxu0
    %v859 = vrot.slane %v853, 6
    %v860 = vrot.slane %v855, 6
    %v863 = vadd.f32 %v307, %v859
    %v864 = vadd.f32 %v308, %v860
    %v865 = vxor.u32 %v863, 2147483648
    %v866 = vmul.f32 %v865, 1.442695
    %v867 = vpow.pop %v866
    %v868 = vadd.f32 %v867, 1.0
    %v869 = vrcp.pop %v868
    %v870 = vmul.f32 1.0, %v869
    %v871 = vtanh.pop %v864
    %v872 = vxor.u32 %v864, 2147483648
    %v873 = vmul.f32 %v872, 1.442695
    %v874 = vpow.pop %v873
    %v875 = vadd.f32 %v874, 1.0
    %v876 = vrcp.pop %v875
    %v877 = vmul.f32 1.0, %v876
    %v879 = vrot.slane %v778, 6
    %v881 = vmul.f32 %v870, %v879
    %v882 = vmul.f32 %v870, %v871
    %884 = vrot.lane.b32.xlu0 %v882, 64
    %v885 = vpop.permute.xlu0 %884
    %v887 = vadd.f32 %v881, %v885
    %v888 = vtanh.pop %v887
    %v889 = vmul.f32 %v877, %v888
    %v891 = vrot.slane %v889, 2
    %892 = vrot.lane.b32.xlu0 %v891, 64
    %v893 = vpop.permute.xlu0 %892
    %v894 = vsel %vm350, %v893, 0
    %896 = vmatprep.subr.mxu0 %v310
    %897 = vmatpush1.msra.mxu0 %v309
    %898 = vmatprep.subr.mxu0 %v312
    %899 = vmatpush1.msra.mxu0 %v311
    %900 = vmatprep.subr.mxu0 %v314
    %901 = vmatpush1.msra.mxu0 %v313
    %902 = vmatprep.subr.mxu0 %v316
    %903 = vmatpush1.msra.mxu0 %v315
    %904 = vmatprep.subr.mxu0 %v318
    %905 = vmatpush1.msra.mxu0 %v317
    %906 = vmatprep.subr.mxu0 %v320
    %907 = vmatpush1.msra.mxu0 %v319
    %908 = vmatprep.subr.mxu0 %v322
    %909 = vmatpush1.msra.mxu0 %v321
    %910 = vmatprep.subr.mxu0 %v324
    %911 = vmatpush1.msra.mxu0 %v323
    %912 = vmatprep.subr.mxu0 0.0
    %913 = vmatpush1.msra.mxu0 0.0
    %914 = vmatprep.subr.mxu0 0.0
    %915 = vmatpush1.msra.mxu0 0.0
    %916 = vmatprep.subr.mxu0 0.0
    %917 = vmatpush1.msra.mxu0 0.0
    %918 = vmatprep.subr.mxu0 0.0
    %919 = vmatpush1.msra.mxu0 0.0
    %920 = vmatprep.subr.mxu0 0.0
    %921 = vmatpush1.msra.mxu0 0.0
    %922 = vmatprep.subr.mxu0 0.0
    %923 = vmatpush1.msra.mxu0 0.0
    %924 = vmatprep.subr.mxu0 0.0
    %925 = vmatpush1.msra.mxu0 0.0
    %926 = vmatprep.subr.mxu0 0.0
    %927 = vmatpush1.msra.mxu0 0.0
    %928 = vmatprep.subr.mxu0 0.0
    %929 = vmatpush1.msra.mxu0 0.0
    %930 = vmatprep.subr.mxu0 0.0
    %931 = vmatpush1.msra.mxu0 0.0
    %932 = vmatprep.subr.mxu0 0.0
    %933 = vmatpush1.msra.mxu0 0.0
    %934 = vmatprep.subr.mxu0 0.0
    %935 = vmatpush1.msra.mxu0 0.0
    %936 = vmatprep.subr.mxu0 0.0
    %937 = vmatpush1.msra.mxu0 0.0
    %938 = vmatprep.subr.mxu0 0.0
    %939 = vmatpush1.msra.mxu0 0.0
    %940 = vmatprep.subr.mxu0 0.0
    %941 = vmatpush1.msra.mxu0 0.0
    %942 = vmatprep.subr.mxu0 0.0
    %943 = vmatpush1.msra.mxu0 0.0
    %944 = vmatprep.subr.mxu0 0.0
    %945 = vmatpush1.msra.mxu0 0.0
    %946 = vmatprep.subr.mxu0 0.0
    %947 = vmatpush1.msra.mxu0 0.0
    %948 = vmatprep.subr.mxu0 0.0
    %949 = vmatpush1.msra.mxu0 0.0
    %950 = vmatprep.subr.mxu0 0.0
    %951 = vmatpush1.msra.mxu0 0.0
    %952 = vmatprep.subr.mxu0 0.0
    %953 = vmatpush1.msra.mxu0 0.0
    %954 = vmatprep.subr.mxu0 0.0
    %955 = vmatpush1.msra.mxu0 0.0
    %956 = vmatprep.subr.mxu0 0.0
    %957 = vmatpush1.msra.mxu0 0.0
    %958 = vmatprep.subr.mxu0 0.0
    %959 = vmatpush1.msra.mxu0 0.0
    %960 = vmatprep.mubr.f32.mxu0 0.0
    %961 = vmatmul.mubr.f32.gmra.mrb[0].mxu0 %v894
    %v962 = vpop.f32.mrb[0].mxu0
    %v963 = vadd.f32 0.0, %v962
    %v964 = vpop.f32.mrb[0].mxu0
    %v965 = vadd.f32 0.0, %v964
    %966 = vdwg.mxu0
    %v969 = vrot.slane %v963, 4
    %v970 = vrot.slane %v965, 4
    %v973 = vadd.f32 %v307, %v969
    %v974 = vadd.f32 %v308, %v970
    %v975 = vxor.u32 %v973, 2147483648
    %v976 = vmul.f32 %v975, 1.442695
    %v977 = vpow.pop %v976
    %v978 = vadd.f32 %v977, 1.0
    %v979 = vrcp.pop %v978
    %v980 = vmul.f32 1.0, %v979
    %v981 = vtanh.pop %v974
    %v982 = vxor.u32 %v974, 2147483648
    %v983 = vmul.f32 %v982, 1.442695
    %v984 = vpow.pop %v983
    %v985 = vadd.f32 %v984, 1.0
    %v986 = vrcp.pop %v985
    %v987 = vmul.f32 1.0, %v986
    %v989 = vrot.slane %v887, 6
    %v991 = vmul.f32 %v980, %v989
    %v992 = vmul.f32 %v980, %v981
    %994 = vrot.lane.b32.xlu0 %v992, 64
    %v995 = vpop.permute.xlu0 %994
    %v997 = vadd.f32 %v991, %v995
    %v998 = vtanh.pop %v997
    %v999 = vmul.f32 %v987, %v998
    %v1001 = vrot.slane %v999, 4
    %1002 = vrot.lane.b32.xlu0 %v1001, 64
    %v1003 = vpop.permute.xlu0 %1002
    %v1004 = vsel %vm350, %v1003, 0
    %1006 = vmatprep.subr.mxu0 %v310
    %1007 = vmatpush1.msra.mxu0 %v309
    %1008 = vmatprep.subr.mxu0 %v312
    %1009 = vmatpush1.msra.mxu0 %v311
    %1010 = vmatprep.subr.mxu0 %v314
    %1011 = vmatpush1.msra.mxu0 %v313
    %1012 = vmatprep.subr.mxu0 %v316
    %1013 = vmatpush1.msra.mxu0 %v315
    %1014 = vmatprep.subr.mxu0 %v318
    %1015 = vmatpush1.msra.mxu0 %v317
    %1016 = vmatprep.subr.mxu0 %v320
    %1017 = vmatpush1.msra.mxu0 %v319
    %1018 = vmatprep.subr.mxu0 %v322
    %1019 = vmatpush1.msra.mxu0 %v321
    %1020 = vmatprep.subr.mxu0 %v324
    %1021 = vmatpush1.msra.mxu0 %v323
    %1022 = vmatprep.subr.mxu0 0.0
    %1023 = vmatpush1.msra.mxu0 0.0
    %1024 = vmatprep.subr.mxu0 0.0
    %1025 = vmatpush1.msra.mxu0 0.0
    %1026 = vmatprep.subr.mxu0 0.0
    %1027 = vmatpush1.msra.mxu0 0.0
    %1028 = vmatprep.subr.mxu0 0.0
    %1029 = vmatpush1.msra.mxu0 0.0
    %1030 = vmatprep.subr.mxu0 0.0
    %1031 = vmatpush1.msra.mxu0 0.0
    %1032 = vmatprep.subr.mxu0 0.0
    %1033 = vmatpush1.msra.mxu0 0.0
    %1034 = vmatprep.subr.mxu0 0.0
    %1035 = vmatpush1.msra.mxu0 0.0
    %1036 = vmatprep.subr.mxu0 0.0
    %1037 = vmatpush1.msra.mxu0 0.0
    %1038 = vmatprep.subr.mxu0 0.0
    %1039 = vmatpush1.msra.mxu0 0.0
    %1040 = vmatprep.subr.mxu0 0.0
    %1041 = vmatpush1.msra.mxu0 0.0
    %1042 = vmatprep.subr.mxu0 0.0
    %1043 = vmatpush1.msra.mxu0 0.0
    %1044 = vmatprep.subr.mxu0 0.0
    %1045 = vmatpush1.msra.mxu0 0.0
    %1046 = vmatprep.subr.mxu0 0.0
    %1047 = vmatpush1.msra.mxu0 0.0
    %1048 = vmatprep.subr.mxu0 0.0
    %1049 = vmatpush1.msra.mxu0 0.0
    %1050 = vmatprep.subr.mxu0 0.0
    %1051 = vmatpush1.msra.mxu0 0.0
    %1052 = vmatprep.subr.mxu0 0.0
    %1053 = vmatpush1.msra.mxu0 0.0
    %1054 = vmatprep.subr.mxu0 0.0
    %1055 = vmatpush1.msra.mxu0 0.0
    %1056 = vmatprep.subr.mxu0 0.0
    %1057 = vmatpush1.msra.mxu0 0.0
    %1058 = vmatprep.subr.mxu0 0.0
    %1059 = vmatpush1.msra.mxu0 0.0
    %1060 = vmatprep.subr.mxu0 0.0
    %1061 = vmatpush1.msra.mxu0 0.0
    %1062 = vmatprep.subr.mxu0 0.0
    %1063 = vmatpush1.msra.mxu0 0.0
    %1064 = vmatprep.subr.mxu0 0.0
    %1065 = vmatpush1.msra.mxu0 0.0
    %1066 = vmatprep.subr.mxu0 0.0
    %1067 = vmatpush1.msra.mxu0 0.0
    %1068 = vmatprep.subr.mxu0 0.0
    %1069 = vmatpush1.msra.mxu0 0.0
    %1070 = vmatprep.mubr.f32.mxu0 0.0
    %1071 = vmatmul.mubr.f32.gmra.mrb[0].mxu0 %v1004
    %v1072 = vpop.f32.mrb[0].mxu0
    %v1073 = vadd.f32 0.0, %v1072
    %v1074 = vpop.f32.mrb[0].mxu0
    %v1075 = vadd.f32 0.0, %v1074
    %1076 = vdwg.mxu0
    %v1079 = vrot.slane %v1073, 2
    %v1080 = vrot.slane %v1075, 2
    %v1083 = vadd.f32 %v307, %v1079
    %v1084 = vadd.f32 %v308, %v1080
    %v1085 = vxor.u32 %v1083, 2147483648
    %v1086 = vmul.f32 %v1085, 1.442695
    %v1087 = vpow.pop %v1086
    %v1088 = vadd.f32 %v1087, 1.0
    %v1089 = vrcp.pop %v1088
    %v1090 = vmul.f32 1.0, %v1089
    %v1091 = vtanh.pop %v1084
    %v1092 = vxor.u32 %v1084, 2147483648
    %v1093 = vmul.f32 %v1092, 1.442695
    %v1094 = vpow.pop %v1093
    %v1095 = vadd.f32 %v1094, 1.0
    %v1096 = vrcp.pop %v1095
    %v1097 = vmul.f32 1.0, %v1096
    %v1099 = vrot.slane %v997, 6
    %v1101 = vmul.f32 %v1090, %v1099
    %v1102 = vmul.f32 %v1090, %v1091
    %1104 = vrot.lane.b32.xlu0 %v1102, 64
    %v1105 = vpop.permute.xlu0 %1104
    %v1107 = vadd.f32 %v1101, %v1105
    %v1108 = vtanh.pop %v1107
    %v1109 = vmul.f32 %v1097, %v1108
    %v1112 = vrot.slane %v1109, 6
    %1113 = vrot.lane.b32.xlu0 %v1112, 64
    %v1114 = vpop.permute.xlu0 %1113
    %vm1117 = vcmask 261120
    %v1118 = vsel %vm1117, %v349, %v1114
    %v1119 = vsel %vm350, %v1118, %v1112
    %vm1120 = vcmask 785408
    %v1121 = vsel %vm1120, %v1119, %v346
    %1122 = vrot.lane.b32.xlu0 %v456, 64
    %v1123 = vpop.permute.xlu0 %1122
    %v1125 = vrot.slane %v999, 2
    %1126 = vrot.lane.b32.xlu0 %v1125, 64
    %v1127 = vpop.permute.xlu0 %1126
    %v1130 = vsel %vm1117, %v1123, %v1127
    %v1131 = vsel %vm350, %v1130, %v1125
    %v1132 = vsel %vm1120, %v1131, %v456
    %1133 = vrot.lane.b32.xlu0 %v566, 64
    %v1134 = vpop.permute.xlu0 %1133
    %v1136 = vrot.slane %v889, 6
    %1137 = vrot.lane.b32.xlu0 %v1136, 64
    %v1138 = vpop.permute.xlu0 %1137
    %v1141 = vsel %vm1117, %v1134, %v1138
    %v1142 = vsel %vm350, %v1141, %v1136
    %v1143 = vsel %vm1120, %v1142, %v566
    %1144 = vrot.lane.b32.xlu0 %v676, 64
    %v1145 = vpop.permute.xlu0 %1144
    %v1147 = vrot.slane %v780, 2
    %1148 = vrot.lane.b32.xlu0 %v1147, 64
    %v1149 = vpop.permute.xlu0 %1148
    %v1152 = vsel %vm1117, %v1145, %v1149
    %v1153 = vsel %vm350, %v1152, %v1147
    %v1154 = vsel %vm1120, %v1153, %v676
    %v1158 = vsel %vm1117, %v783, %v680
    %v1159 = vsel %vm350, %v1158, %v678
    %v1160 = vsel %vm1120, %v1159, %v780
    %1161 = vrot.lane.b32.xlu0 %v889, 64
    %v1162 = vpop.permute.xlu0 %1161
    %v1164 = vrot.slane %v566, 2
    %1165 = vrot.lane.b32.xlu0 %v1164, 64
    %v1166 = vpop.permute.xlu0 %1165
    %v1169 = vsel %vm1117, %v1162, %v1166
    %v1170 = vsel %vm350, %v1169, %v1164
    %v1171 = vsel %vm1120, %v1170, %v889
    %1172 = vrot.lane.b32.xlu0 %v999, 64
    %v1173 = vpop.permute.xlu0 %1172
    %v1175 = vrot.slane %v456, 6
    %1176 = vrot.lane.b32.xlu0 %v1175, 64
    %v1177 = vpop.permute.xlu0 %1176
    %v1180 = vsel %vm1117, %v1173, %v1177
    %v1181 = vsel %vm350, %v1180, %v1175
    %v1182 = vsel %vm1120, %v1181, %v999
    %1183 = vrot.lane.b32.xlu0 %v1109, 64
    %v1184 = vpop.permute.xlu0 %1183
    %v1186 = vrot.slane %v346, 2
    %1187 = vrot.lane.b32.xlu0 %v1186, 64
    %v1188 = vpop.permute.xlu0 %1187
    %v1191 = vsel %vm1117, %v1184, %v1188
    %v1192 = vsel %vm350, %v1191, %v1186
    %v1193 = vsel %vm1120, %v1192, %v1109
    %vm1194 = vcmask 1041408
    %v1195 = vsel %vm1194, %v1121, %v1132
    %vm1196 = vcmask 1043456
    %v1197 = vsel %vm1196, %v1195, %v1143
    %vm1198 = vcmask 1045504
    %v1199 = vsel %vm1198, %v1197, %v1154
    %v1200 = vsel %vm1194, %v1160, %v1171
    %v1201 = vsel %vm1196, %v1200, %v1182
    %v1202 = vsel %vm1198, %v1201, %v1193
    %v1203 = vld [vmem:[#allocation3] sm:$0xff]
    %v1204 = vld [vmem:[#allocation3 + $0x8] sm:$0xff]
    %v1205 = vld [vmem:[#allocation3 + $0x10] sm:$0xff]
    %v1206 = vld [vmem:[#allocation3 + $0x18] sm:$0xff]
    %v1207 = vld [vmem:[#allocation3 + $0x20] sm:$0xff]
    %v1208 = vld [vmem:[#allocation3 + $0x28] sm:$0xff]
    %v1209 = vld [vmem:[#allocation3 + $0x30] sm:$0xff]
    %v1210 = vld [vmem:[#allocation3 + $0x38] sm:$0xff]
    %v1211 = vld [vmem:[#allocation3 + $0x40] sm:$0xff]
    %v1212 = vld [vmem:[#allocation3 + $0x48] sm:$0xff]
    %v1213 = vld [vmem:[#allocation3 + $0x50] sm:$0xff]
    %v1214 = vld [vmem:[#allocation3 + $0x58] sm:$0xff]
    %v1215 = vld [vmem:[#allocation3 + $0x60] sm:$0xff]
    %v1216 = vld [vmem:[#allocation3 + $0x68] sm:$0xff]
    %v1217 = vld [vmem:[#allocation3 + $0x70] sm:$0xff]
    %v1218 = vld [vmem:[#allocation3 + $0x78] sm:$0xff]
    %v1219 = vld [vmem:[#allocation3 + $0x80] sm:$0xff]
    %v1220 = vld [vmem:[#allocation3 + $0x88] sm:$0xff]
    %v1221 = vld [vmem:[#allocation3 + $0x90] sm:$0xff]
    %v1222 = vld [vmem:[#allocation3 + $0x98] sm:$0xff]
    %v1223 = vld [vmem:[#allocation3 + $0xa0] sm:$0xff]
    %v1224 = vld [vmem:[#allocation3 + $0xa8] sm:$0xff]
    %v1225 = vld [vmem:[#allocation3 + $0xb0] sm:$0xff]
    %v1226 = vld [vmem:[#allocation3 + $0xb8] sm:$0xff]
    %v1227 = vld [vmem:[#allocation3 + $0xc0] sm:$0xff]
    %v1228 = vld [vmem:[#allocation3 + $0xc8] sm:$0xff]
    %v1229 = vld [vmem:[#allocation3 + $0xd0] sm:$0xff]
    %v1230 = vld [vmem:[#allocation3 + $0xd8] sm:$0xff]
    %v1231 = vld [vmem:[#allocation3 + $0xe0] sm:$0xff]
    %v1232 = vld [vmem:[#allocation3 + $0xe8] sm:$0xff]
    %v1233 = vld [vmem:[#allocation3 + $0xf0] sm:$0xff]
    %v1234 = vld [vmem:[#allocation3 + $0xf8] sm:$0xff]
    %v1235 = vld [vmem:[#allocation7] sm:$0x3]
    %v1237 = vlaneseq
    %v1238 = vshrl.u32 %v1237, 7
    %v1239 = vsub.s32 0, %v1238
    %v1240 = vrot.slane %v1235, %v1239
    %v1241 = vlaneseq
    %v1242 = vshrl.u32 %v1241, 7
    %v1243 = vsub.s32 1, %v1242
    %v1244 = vrot.slane %v1235, %v1243
    %1247 = vmatprep.subr.mxu0 %v1204
    %1248 = vmatpush1.msra.mxu0 %v1203
    %1249 = vmatprep.subr.mxu0 %v1206
    %1250 = vmatpush1.msra.mxu0 %v1205
    %1251 = vmatprep.subr.mxu0 %v1208
    %1252 = vmatpush1.msra.mxu0 %v1207
    %1253 = vmatprep.subr.mxu0 %v1210
    %1254 = vmatpush1.msra.mxu0 %v1209
    %1255 = vmatprep.subr.mxu0 %v1212
    %1256 = vmatpush1.msra.mxu0 %v1211
    %1257 = vmatprep.subr.mxu0 %v1214
    %1258 = vmatpush1.msra.mxu0 %v1213
    %1259 = vmatprep.subr.mxu0 %v1216
    %1260 = vmatpush1.msra.mxu0 %v1215
    %1261 = vmatprep.subr.mxu0 %v1218
    %1262 = vmatpush1.msra.mxu0 %v1217
    %1263 = vmatprep.subr.mxu0 %v1220
    %1264 = vmatpush1.msra.mxu0 %v1219
    %1265 = vmatprep.subr.mxu0 %v1222
    %1266 = vmatpush1.msra.mxu0 %v1221
    %1267 = vmatprep.subr.mxu0 %v1224
    %1268 = vmatpush1.msra.mxu0 %v1223
    %1269 = vmatprep.subr.mxu0 %v1226
    %1270 = vmatpush1.msra.mxu0 %v1225
    %1271 = vmatprep.subr.mxu0 %v1228
    %1272 = vmatpush1.msra.mxu0 %v1227
    %1273 = vmatprep.subr.mxu0 %v1230
    %1274 = vmatpush1.msra.mxu0 %v1229
    %1275 = vmatprep.subr.mxu0 %v1232
    %1276 = vmatpush1.msra.mxu0 %v1231
    %1277 = vmatprep.subr.mxu0 %v1234
    %1278 = vmatpush1.msra.mxu0 %v1233
    %1279 = vmatprep.subr.mxu0 0.0
    %1280 = vmatpush1.msra.mxu0 0.0
    %1281 = vmatprep.subr.mxu0 0.0
    %1282 = vmatpush1.msra.mxu0 0.0
    %1283 = vmatprep.subr.mxu0 0.0
    %1284 = vmatpush1.msra.mxu0 0.0
    %1285 = vmatprep.subr.mxu0 0.0
    %1286 = vmatpush1.msra.mxu0 0.0
    %1287 = vmatprep.subr.mxu0 0.0
    %1288 = vmatpush1.msra.mxu0 0.0
    %1289 = vmatprep.subr.mxu0 0.0
    %1290 = vmatpush1.msra.mxu0 0.0
    %1291 = vmatprep.subr.mxu0 0.0
    %1292 = vmatpush1.msra.mxu0 0.0
    %1293 = vmatprep.subr.mxu0 0.0
    %1294 = vmatpush1.msra.mxu0 0.0
    %1295 = vmatprep.subr.mxu0 0.0
    %1296 = vmatpush1.msra.mxu0 0.0
    %1297 = vmatprep.subr.mxu0 0.0
    %1298 = vmatpush1.msra.mxu0 0.0
    %1299 = vmatprep.subr.mxu0 0.0
    %1300 = vmatpush1.msra.mxu0 0.0
    %1301 = vmatprep.subr.mxu0 0.0
    %1302 = vmatpush1.msra.mxu0 0.0
    %1303 = vmatprep.subr.mxu0 0.0
    %1304 = vmatpush1.msra.mxu0 0.0
    %1305 = vmatprep.subr.mxu0 0.0
    %1306 = vmatpush1.msra.mxu0 0.0
    %1307 = vmatprep.subr.mxu0 0.0
    %1308 = vmatpush1.msra.mxu0 0.0
    %1309 = vmatprep.subr.mxu0 0.0
    %1310 = vmatpush1.msra.mxu0 0.0
    %1311 = vmatprep.mubr.f32.mxu0 0.0
    %1312 = vmatmul.mubr.f32.gmra.mrb[0].mxu0 %v1199
    %v1313 = vpop.f32.mrb[0].mxu0
    %v1314 = vadd.f32 %v1240, %v1313
    %v1315 = vpop.f32.mrb[0].mxu0
    %v1316 = vadd.f32 %v1244, %v1315
    %1317 = vmatprep.mubr.f32.mxu0 0.0
    %1318 = vmatmul.mubr.f32.gmra.mrb[0].mxu0 %v1202
    %v1319 = vpop.f32.mrb[0].mxu0
    %v1320 = vadd.f32 %v1240, %v1319
    %v1321 = vpop.f32.mrb[0].mxu0
    %v1322 = vadd.f32 %v1244, %v1321
    %1323 = vdwg.mxu0
    %v1324 = vld [vmem:[#allocation5] sm:$0xff]
    %v1325 = vld [vmem:[#allocation5 + $0x8] sm:$0xff]
    %v1326 = vld [vmem:[#allocation5 + $0x10] sm:$0xff]
    %v1327 = vld [vmem:[#allocation5 + $0x18] sm:$0xff]
    %v1328 = vld [vmem:[#allocation5 + $0x20] sm:$0xff]
    %v1329 = vld [vmem:[#allocation5 + $0x28] sm:$0xff]
    %v1330 = vld [vmem:[#allocation5 + $0x30] sm:$0xff]
    %v1331 = vld [vmem:[#allocation5 + $0x38] sm:$0xff]
    %v1332 = vld [vmem:[#allocation5 + $0x40] sm:$0xff]
    %v1333 = vld [vmem:[#allocation5 + $0x48] sm:$0xff]
    %v1334 = vld [vmem:[#allocation5 + $0x50] sm:$0xff]
    %v1335 = vld [vmem:[#allocation5 + $0x58] sm:$0xff]
    %v1336 = vld [vmem:[#allocation5 + $0x60] sm:$0xff]
    %v1337 = vld [vmem:[#allocation5 + $0x68] sm:$0xff]
    %v1338 = vld [vmem:[#allocation5 + $0x70] sm:$0xff]
    %v1339 = vld [vmem:[#allocation5 + $0x78] sm:$0xff]
    %v1340 = vxor.u32 %v1314, 2147483648
    %v1341 = vmul.f32 %v1340, 1.442695
    %v1342 = vpow.pop %v1341
    %v1343 = vadd.f32 %v1342, 1.0
    %v1344 = vrcp.pop %v1343
    %v1345 = vmul.f32 1.0, %v1344
    %v1346 = vtanh.pop %v1316
    %v1347 = vxor.u32 %v1316, 2147483648
    %v1348 = vmul.f32 %v1347, 1.442695
    %v1349 = vpow.pop %v1348
    %v1350 = vadd.f32 %v1349, 1.0
    %v1351 = vrcp.pop %v1350
    %v1352 = vmul.f32 1.0, %v1351
    %v1353 = vmul.f32 %v1345, 0.0
    %v1354 = vmul.f32 %v1345, %v1346
    %1356 = vrot.lane.b32.xlu0 %v1354, 64
    %v1357 = vpop.permute.xlu0 %1356
    %v1359 = vadd.f32 %v1353, %v1357
    %v1360 = vtanh.pop %v1359
    %v1361 = vmul.f32 %v1352, %v1360
    %1363 = vrot.lane.b32.xlu0 %v1361, 64
    %v1364 = vpop.permute.xlu0 %1363
    %v1365 = vsel %vm350, %v1364, 0
    %1367 = vmatprep.subr.mxu0 %v1325
    %1368 = vmatpush1.msra.mxu0 %v1324
    %1369 = vmatprep.subr.mxu0 %v1327
    %1370 = vmatpush1.msra.mxu0 %v1326
    %1371 = vmatprep.subr.mxu0 %v1329
    %1372 = vmatpush1.msra.mxu0 %v1328
    %1373 = vmatprep.subr.mxu0 %v1331
    %1374 = vmatpush1.msra.mxu0 %v1330
    %1375 = vmatprep.subr.mxu0 %v1333
    %1376 = vmatpush1.msra.mxu0 %v1332
    %1377 = vmatprep.subr.mxu0 %v1335
    %1378 = vmatpush1.msra.mxu0 %v1334
    %1379 = vmatprep.subr.mxu0 %v1337
    %1380 = vmatpush1.msra.mxu0 %v1336
    %1381 = vmatprep.subr.mxu0 %v1339
    %1382 = vmatpush1.msra.mxu0 %v1338
    %1383 = vmatprep.subr.mxu0 0.0
    %1384 = vmatpush1.msra.mxu0 0.0
    %1385 = vmatprep.subr.mxu0 0.0
    %1386 = vmatpush1.msra.mxu0 0.0
    %1387 = vmatprep.subr.mxu0 0.0
    %1388 = vmatpush1.msra.mxu0 0.0
    %1389 = vmatprep.subr.mxu0 0.0
    %1390 = vmatpush1.msra.mxu0 0.0
    %1391 = vmatprep.subr.mxu0 0.0
    %1392 = vmatpush1.msra.mxu0 0.0
    %1393 = vmatprep.subr.mxu0 0.0
    %1394 = vmatpush1.msra.mxu0 0.0
    %1395 = vmatprep.subr.mxu0 0.0
    %1396 = vmatpush1.msra.mxu0 0.0
    %1397 = vmatprep.subr.mxu0 0.0
    %1398 = vmatpush1.msra.mxu0 0.0
    %1399 = vmatprep.subr.mxu0 0.0
    %1400 = vmatpush1.msra.mxu0 0.0
    %1401 = vmatprep.subr.mxu0 0.0
    %1402 = vmatpush1.msra.mxu0 0.0
    %1403 = vmatprep.subr.mxu0 0.0
    %1404 = vmatpush1.msra.mxu0 0.0
    %1405 = vmatprep.subr.mxu0 0.0
    %1406 = vmatpush1.msra.mxu0 0.0
    %1407 = vmatprep.subr.mxu0 0.0
    %1408 = vmatpush1.msra.mxu0 0.0
    %1409 = vmatprep.subr.mxu0 0.0
    %1410 = vmatpush1.msra.mxu0 0.0
    %1411 = vmatprep.subr.mxu0 0.0
    %1412 = vmatpush1.msra.mxu0 0.0
    %1413 = vmatprep.subr.mxu0 0.0
    %1414 = vmatpush1.msra.mxu0 0.0
    %1415 = vmatprep.subr.mxu0 0.0
    %1416 = vmatpush1.msra.mxu0 0.0
    %1417 = vmatprep.subr.mxu0 0.0
    %1418 = vmatpush1.msra.mxu0 0.0
    %1419 = vmatprep.subr.mxu0 0.0
    %1420 = vmatpush1.msra.mxu0 0.0
    %1421 = vmatprep.subr.mxu0 0.0
    %1422 = vmatpush1.msra.mxu0 0.0
    %1423 = vmatprep.subr.mxu0 0.0
    %1424 = vmatpush1.msra.mxu0 0.0
    %1425 = vmatprep.subr.mxu0 0.0
    %1426 = vmatpush1.msra.mxu0 0.0
    %1427 = vmatprep.subr.mxu0 0.0
    %1428 = vmatpush1.msra.mxu0 0.0
    %1429 = vmatprep.subr.mxu0 0.0
    %1430 = vmatpush1.msra.mxu0 0.0
    %1431 = vmatprep.mubr.f32.mxu0 0.0
    %1432 = vmatmul.mubr.f32.gmra.mrb[0].mxu0 %v1365
    %v1433 = vpop.f32.mrb[0].mxu0
    %v1434 = vadd.f32 0.0, %v1433
    %v1435 = vpop.f32.mrb[0].mxu0
    %v1436 = vadd.f32 0.0, %v1435
    %1437 = vdwg.mxu0
    %v1440 = vrot.slane %v1434, 6
    %v1441 = vrot.slane %v1436, 6
    %v1444 = vadd.f32 %v1314, %v1440
    %v1445 = vadd.f32 %v1316, %v1441
    %v1446 = vxor.u32 %v1444, 2147483648
    %v1447 = vmul.f32 %v1446, 1.442695
    %v1448 = vpow.pop %v1447
    %v1449 = vadd.f32 %v1448, 1.0
    %v1450 = vrcp.pop %v1449
    %v1451 = vmul.f32 1.0, %v1450
    %v1452 = vtanh.pop %v1445
    %v1453 = vxor.u32 %v1445, 2147483648
    %v1454 = vmul.f32 %v1453, 1.442695
    %v1455 = vpow.pop %v1454
    %v1456 = vadd.f32 %v1455, 1.0
    %v1457 = vrcp.pop %v1456
    %v1458 = vmul.f32 1.0, %v1457
    %v1460 = vrot.slane %v1359, 6
    %v1462 = vmul.f32 %v1451, %v1460
    %v1463 = vmul.f32 %v1451, %v1452
    %1465 = vrot.lane.b32.xlu0 %v1463, 64
    %v1466 = vpop.permute.xlu0 %1465
    %v1468 = vadd.f32 %v1462, %v1466
    %v1469 = vtanh.pop %v1468
    %v1470 = vmul.f32 %v1458, %v1469
    %v1472 = vrot.slane %v1470, 2
    %1473 = vrot.lane.b32.xlu0 %v1472, 64
    %v1474 = vpop.permute.xlu0 %1473
    %v1475 = vsel %vm350, %v1474, 0
    %1477 = vmatprep.subr.mxu0 %v1325
    %1478 = vmatpush1.msra.mxu0 %v1324
    %1479 = vmatprep.subr.mxu0 %v1327
    %1480 = vmatpush1.msra.mxu0 %v1326
    %1481 = vmatprep.subr.mxu0 %v1329
    %1482 = vmatpush1.msra.mxu0 %v1328
    %1483 = vmatprep.subr.mxu0 %v1331
    %1484 = vmatpush1.msra.mxu0 %v1330
    %1485 = vmatprep.subr.mxu0 %v1333
    %1486 = vmatpush1.msra.mxu0 %v1332
    %1487 = vmatprep.subr.mxu0 %v1335
    %1488 = vmatpush1.msra.mxu0 %v1334
    %1489 = vmatprep.subr.mxu0 %v1337
    %1490 = vmatpush1.msra.mxu0 %v1336
    %1491 = vmatprep.subr.mxu0 %v1339
    %1492 = vmatpush1.msra.mxu0 %v1338
    %1493 = vmatprep.subr.mxu0 0.0
    %1494 = vmatpush1.msra.mxu0 0.0
    %1495 = vmatprep.subr.mxu0 0.0
    %1496 = vmatpush1.msra.mxu0 0.0
    %1497 = vmatprep.subr.mxu0 0.0
    %1498 = vmatpush1.msra.mxu0 0.0
    %1499 = vmatprep.subr.mxu0 0.0
    %1500 = vmatpush1.msra.mxu0 0.0
    %1501 = vmatprep.subr.mxu0 0.0
    %1502 = vmatpush1.msra.mxu0 0.0
    %1503 = vmatprep.subr.mxu0 0.0
    %1504 = vmatpush1.msra.mxu0 0.0
    %1505 = vmatprep.subr.mxu0 0.0
    %1506 = vmatpush1.msra.mxu0 0.0
    %1507 = vmatprep.subr.mxu0 0.0
    %1508 = vmatpush1.msra.mxu0 0.0
    %1509 = vmatprep.subr.mxu0 0.0
    %1510 = vmatpush1.msra.mxu0 0.0
    %1511 = vmatprep.subr.mxu0 0.0
    %1512 = vmatpush1.msra.mxu0 0.0
    %1513 = vmatprep.subr.mxu0 0.0
    %1514 = vmatpush1.msra.mxu0 0.0
    %1515 = vmatprep.subr.mxu0 0.0
    %1516 = vmatpush1.msra.mxu0 0.0
    %1517 = vmatprep.subr.mxu0 0.0
    %1518 = vmatpush1.msra.mxu0 0.0
    %1519 = vmatprep.subr.mxu0 0.0
    %1520 = vmatpush1.msra.mxu0 0.0
    %1521 = vmatprep.subr.mxu0 0.0
    %1522 = vmatpush1.msra.mxu0 0.0
    %1523 = vmatprep.subr.mxu0 0.0
    %1524 = vmatpush1.msra.mxu0 0.0
    %1525 = vmatprep.subr.mxu0 0.0
    %1526 = vmatpush1.msra.mxu0 0.0
    %1527 = vmatprep.subr.mxu0 0.0
    %1528 = vmatpush1.msra.mxu0 0.0
    %1529 = vmatprep.subr.mxu0 0.0
    %1530 = vmatpush1.msra.mxu0 0.0
    %1531 = vmatprep.subr.mxu0 0.0
    %1532 = vmatpush1.msra.mxu0 0.0
    %1533 = vmatprep.subr.mxu0 0.0
    %1534 = vmatpush1.msra.mxu0 0.0
    %1535 = vmatprep.subr.mxu0 0.0
    %1536 = vmatpush1.msra.mxu0 0.0
    %1537 = vmatprep.subr.mxu0 0.0
    %1538 = vmatpush1.msra.mxu0 0.0
    %1539 = vmatprep.subr.mxu0 0.0
    %1540 = vmatpush1.msra.mxu0 0.0
    %1541 = vmatprep.mubr.f32.mxu0 0.0
    %1542 = vmatmul.mubr.f32.gmra.mrb[0].mxu0 %v1475
    %v1543 = vpop.f32.mrb[0].mxu0
    %v1544 = vadd.f32 0.0, %v1543
    %v1545 = vpop.f32.mrb[0].mxu0
    %v1546 = vadd.f32 0.0, %v1545
    %1547 = vdwg.mxu0
    %v1550 = vrot.slane %v1544, 4
    %v1551 = vrot.slane %v1546, 4
    %v1554 = vadd.f32 %v1314, %v1550
    %v1555 = vadd.f32 %v1316, %v1551
    %v1556 = vxor.u32 %v1554, 2147483648
    %v1557 = vmul.f32 %v1556, 1.442695
    %v1558 = vpow.pop %v1557
    %v1559 = vadd.f32 %v1558, 1.0
    %v1560 = vrcp.pop %v1559
    %v1561 = vmul.f32 1.0, %v1560
    %v1562 = vtanh.pop %v1555
    %v1563 = vxor.u32 %v1555, 2147483648
    %v1564 = vmul.f32 %v1563, 1.442695
    %v1565 = vpow.pop %v1564
    %v1566 = vadd.f32 %v1565, 1.0
    %v1567 = vrcp.pop %v1566
    %v1568 = vmul.f32 1.0, %v1567
    %v1570 = vrot.slane %v1468, 6
    %v1572 = vmul.f32 %v1561, %v1570
    %v1573 = vmul.f32 %v1561, %v1562
    %1575 = vrot.lane.b32.xlu0 %v1573, 64
    %v1576 = vpop.permute.xlu0 %1575
    %v1578 = vadd.f32 %v1572, %v1576
    %v1579 = vtanh.pop %v1578
    %v1580 = vmul.f32 %v1568, %v1579
    %v1582 = vrot.slane %v1580, 4
    %1583 = vrot.lane.b32.xlu0 %v1582, 64
    %v1584 = vpop.permute.xlu0 %1583
    %v1585 = vsel %vm350, %v1584, 0
    %1587 = vmatprep.subr.mxu0 %v1325
    %1588 = vmatpush1.msra.mxu0 %v1324
    %1589 = vmatprep.subr.mxu0 %v1327
    %1590 = vmatpush1.msra.mxu0 %v1326
    %1591 = vmatprep.subr.mxu0 %v1329
    %1592 = vmatpush1.msra.mxu0 %v1328
    %1593 = vmatprep.subr.mxu0 %v1331
    %1594 = vmatpush1.msra.mxu0 %v1330
    %1595 = vmatprep.subr.mxu0 %v1333
    %1596 = vmatpush1.msra.mxu0 %v1332
    %1597 = vmatprep.subr.mxu0 %v1335
    %1598 = vmatpush1.msra.mxu0 %v1334
    %1599 = vmatprep.subr.mxu0 %v1337
    %1600 = vmatpush1.msra.mxu0 %v1336
    %1601 = vmatprep.subr.mxu0 %v1339
    %1602 = vmatpush1.msra.mxu0 %v1338
    %1603 = vmatprep.subr.mxu0 0.0
    %1604 = vmatpush1.msra.mxu0 0.0
    %1605 = vmatprep.subr.mxu0 0.0
    %1606 = vmatpush1.msra.mxu0 0.0
    %1607 = vmatprep.subr.mxu0 0.0
    %1608 = vmatpush1.msra.mxu0 0.0
    %1609 = vmatprep.subr.mxu0 0.0
    %1610 = vmatpush1.msra.mxu0 0.0
    %1611 = vmatprep.subr.mxu0 0.0
    %1612 = vmatpush1.msra.mxu0 0.0
    %1613 = vmatprep.subr.mxu0 0.0
    %1614 = vmatpush1.msra.mxu0 0.0
    %1615 = vmatprep.subr.mxu0 0.0
    %1616 = vmatpush1.msra.mxu0 0.0
    %1617 = vmatprep.subr.mxu0 0.0
    %1618 = vmatpush1.msra.mxu0 0.0
    %1619 = vmatprep.subr.mxu0 0.0
    %1620 = vmatpush1.msra.mxu0 0.0
    %1621 = vmatprep.subr.mxu0 0.0
    %1622 = vmatpush1.msra.mxu0 0.0
    %1623 = vmatprep.subr.mxu0 0.0
    %1624 = vmatpush1.msra.mxu0 0.0
    %1625 = vmatprep.subr.mxu0 0.0
    %1626 = vmatpush1.msra.mxu0 0.0
    %1627 = vmatprep.subr.mxu0 0.0
    %1628 = vmatpush1.msra.mxu0 0.0
    %1629 = vmatprep.subr.mxu0 0.0
    %1630 = vmatpush1.msra.mxu0 0.0
    %1631 = vmatprep.subr.mxu0 0.0
    %1632 = vmatpush1.msra.mxu0 0.0
    %1633 = vmatprep.subr.mxu0 0.0
    %1634 = vmatpush1.msra.mxu0 0.0
    %1635 = vmatprep.subr.mxu0 0.0
    %1636 = vmatpush1.msra.mxu0 0.0
    %1637 = vmatprep.subr.mxu0 0.0
    %1638 = vmatpush1.msra.mxu0 0.0
    %1639 = vmatprep.subr.mxu0 0.0
    %1640 = vmatpush1.msra.mxu0 0.0
    %1641 = vmatprep.subr.mxu0 0.0
    %1642 = vmatpush1.msra.mxu0 0.0
    %1643 = vmatprep.subr.mxu0 0.0
    %1644 = vmatpush1.msra.mxu0 0.0
    %1645 = vmatprep.subr.mxu0 0.0
    %1646 = vmatpush1.msra.mxu0 0.0
    %1647 = vmatprep.subr.mxu0 0.0
    %1648 = vmatpush1.msra.mxu0 0.0
    %1649 = vmatprep.subr.mxu0 0.0
    %1650 = vmatpush1.msra.mxu0 0.0
    %1651 = vmatprep.mubr.f32.mxu0 0.0
    %1652 = vmatmul.mubr.f32.gmra.mrb[0].mxu0 %v1585
    %v1653 = vpop.f32.mrb[0].mxu0
    %v1654 = vadd.f32 0.0, %v1653
    %v1655 = vpop.f32.mrb[0].mxu0
    %v1656 = vadd.f32 0.0, %v1655
    %1657 = vdwg.mxu0
    %v1660 = vrot.slane %v1654, 2
    %v1661 = vrot.slane %v1656, 2
    %v1664 = vadd.f32 %v1314, %v1660
    %v1665 = vadd.f32 %v1316, %v1661
    %v1666 = vxor.u32 %v1664, 2147483648
    %v1667 = vmul.f32 %v1666, 1.442695
    %v1668 = vpow.pop %v1667
    %v1669 = vadd.f32 %v1668, 1.0
    %v1670 = vrcp.pop %v1669
    %v1671 = vmul.f32 1.0, %v1670
    %v1672 = vtanh.pop %v1665
    %v1673 = vxor.u32 %v1665, 2147483648
    %v1674 = vmul.f32 %v1673, 1.442695
    %v1675 = vpow.pop %v1674
    %v1676 = vadd.f32 %v1675, 1.0
    %v1677 = vrcp.pop %v1676
    %v1678 = vmul.f32 1.0, %v1677
    %v1680 = vrot.slane %v1578, 6
    %v1682 = vmul.f32 %v1671, %v1680
    %v1683 = vmul.f32 %v1671, %v1672
    %1685 = vrot.lane.b32.xlu0 %v1683, 64
    %v1686 = vpop.permute.xlu0 %1685
    %v1688 = vadd.f32 %v1682, %v1686
    %v1689 = vtanh.pop %v1688
    %v1690 = vmul.f32 %v1678, %v1689
    %v1692 = vrot.slane %v1690, 6
    %1693 = vrot.lane.b32.xlu0 %v1692, 64
    %v1694 = vpop.permute.xlu0 %1693
    %v1695 = vsel %vm350, %v1694, 0
    %1697 = vmatprep.subr.mxu0 %v1325
    %1698 = vmatpush1.msra.mxu0 %v1324
    %1699 = vmatprep.subr.mxu0 %v1327
    %1700 = vmatpush1.msra.mxu0 %v1326
    %1701 = vmatprep.subr.mxu0 %v1329
    %1702 = vmatpush1.msra.mxu0 %v1328
    %1703 = vmatprep.subr.mxu0 %v1331
    %1704 = vmatpush1.msra.mxu0 %v1330
    %1705 = vmatprep.subr.mxu0 %v1333
    %1706 = vmatpush1.msra.mxu0 %v1332
    %1707 = vmatprep.subr.mxu0 %v1335
    %1708 = vmatpush1.msra.mxu0 %v1334
    %1709 = vmatprep.subr.mxu0 %v1337
    %1710 = vmatpush1.msra.mxu0 %v1336
    %1711 = vmatprep.subr.mxu0 %v1339
    %1712 = vmatpush1.msra.mxu0 %v1338
    %1713 = vmatprep.subr.mxu0 0.0
    %1714 = vmatpush1.msra.mxu0 0.0
    %1715 = vmatprep.subr.mxu0 0.0
    %1716 = vmatpush1.msra.mxu0 0.0
    %1717 = vmatprep.subr.mxu0 0.0
    %1718 = vmatpush1.msra.mxu0 0.0
    %1719 = vmatprep.subr.mxu0 0.0
    %1720 = vmatpush1.msra.mxu0 0.0
    %1721 = vmatprep.subr.mxu0 0.0
    %1722 = vmatpush1.msra.mxu0 0.0
    %1723 = vmatprep.subr.mxu0 0.0
    %1724 = vmatpush1.msra.mxu0 0.0
    %1725 = vmatprep.subr.mxu0 0.0
    %1726 = vmatpush1.msra.mxu0 0.0
    %1727 = vmatprep.subr.mxu0 0.0
    %1728 = vmatpush1.msra.mxu0 0.0
    %1729 = vmatprep.subr.mxu0 0.0
    %1730 = vmatpush1.msra.mxu0 0.0
    %1731 = vmatprep.subr.mxu0 0.0
    %1732 = vmatpush1.msra.mxu0 0.0
    %1733 = vmatprep.subr.mxu0 0.0
    %1734 = vmatpush1.msra.mxu0 0.0
    %1735 = vmatprep.subr.mxu0 0.0
    %1736 = vmatpush1.msra.mxu0 0.0
    %1737 = vmatprep.subr.mxu0 0.0
    %1738 = vmatpush1.msra.mxu0 0.0
    %1739 = vmatprep.subr.mxu0 0.0
    %1740 = vmatpush1.msra.mxu0 0.0
    %1741 = vmatprep.subr.mxu0 0.0
    %1742 = vmatpush1.msra.mxu0 0.0
    %1743 = vmatprep.subr.mxu0 0.0
    %1744 = vmatpush1.msra.mxu0 0.0
    %1745 = vmatprep.subr.mxu0 0.0
    %1746 = vmatpush1.msra.mxu0 0.0
    %1747 = vmatprep.subr.mxu0 0.0
    %1748 = vmatpush1.msra.mxu0 0.0
    %1749 = vmatprep.subr.mxu0 0.0
    %1750 = vmatpush1.msra.mxu0 0.0
    %1751 = vmatprep.subr.mxu0 0.0
    %1752 = vmatpush1.msra.mxu0 0.0
    %1753 = vmatprep.subr.mxu0 0.0
    %1754 = vmatpush1.msra.mxu0 0.0
    %1755 = vmatprep.subr.mxu0 0.0
    %1756 = vmatpush1.msra.mxu0 0.0
    %1757 = vmatprep.subr.mxu0 0.0
    %1758 = vmatpush1.msra.mxu0 0.0
    %1759 = vmatprep.subr.mxu0 0.0
    %1760 = vmatpush1.msra.mxu0 0.0
    %1761 = vmatprep.mubr.f32.mxu0 0.0
    %1762 = vmatmul.mubr.f32.gmra.mrb[0].mxu0 %v1695
    %v1763 = vpop.f32.mrb[0].mxu0
    %v1764 = vadd.f32 0.0, %v1763
    %v1765 = vpop.f32.mrb[0].mxu0
    %v1766 = vadd.f32 0.0, %v1765
    %1767 = vdwg.mxu0
    %v1768 = vadd.f32 %v1320, %v1764
    %v1769 = vadd.f32 %v1322, %v1766
    %v1770 = vxor.u32 %v1768, 2147483648
    %v1771 = vmul.f32 %v1770, 1.442695
    %v1772 = vpow.pop %v1771
    %v1773 = vadd.f32 %v1772, 1.0
    %v1774 = vrcp.pop %v1773
    %v1775 = vmul.f32 1.0, %v1774
    %v1776 = vtanh.pop %v1769
    %v1777 = vxor.u32 %v1769, 2147483648
    %v1778 = vmul.f32 %v1777, 1.442695
    %v1779 = vpow.pop %v1778
    %v1780 = vadd.f32 %v1779, 1.0
    %v1781 = vrcp.pop %v1780
    %v1782 = vmul.f32 1.0, %v1781
    %v1784 = vrot.slane %v1688, 6
    %v1786 = vmul.f32 %v1775, %v1784
    %v1787 = vmul.f32 %v1775, %v1776
    %1789 = vrot.lane.b32.xlu0 %v1787, 64
    %v1790 = vpop.permute.xlu0 %1789
    %v1792 = vadd.f32 %v1786, %v1790
    %v1793 = vtanh.pop %v1792
    %v1794 = vmul.f32 %v1782, %v1793
    %1796 = vrot.lane.b32.xlu0 %v1794, 64
    %v1797 = vpop.permute.xlu0 %1796
    %v1798 = vsel %vm350, %v1797, 0
    %1800 = vmatprep.subr.mxu0 %v1325
    %1801 = vmatpush1.msra.mxu0 %v1324
    %1802 = vmatprep.subr.mxu0 %v1327
    %1803 = vmatpush1.msra.mxu0 %v1326
    %1804 = vmatprep.subr.mxu0 %v1329
    %1805 = vmatpush1.msra.mxu0 %v1328
    %1806 = vmatprep.subr.mxu0 %v1331
    %1807 = vmatpush1.msra.mxu0 %v1330
    %1808 = vmatprep.subr.mxu0 %v1333
    %1809 = vmatpush1.msra.mxu0 %v1332
    %1810 = vmatprep.subr.mxu0 %v1335
    %1811 = vmatpush1.msra.mxu0 %v1334
    %1812 = vmatprep.subr.mxu0 %v1337
    %1813 = vmatpush1.msra.mxu0 %v1336
    %1814 = vmatprep.subr.mxu0 %v1339
    %1815 = vmatpush1.msra.mxu0 %v1338
    %1816 = vmatprep.subr.mxu0 0.0
    %1817 = vmatpush1.msra.mxu0 0.0
    %1818 = vmatprep.subr.mxu0 0.0
    %1819 = vmatpush1.msra.mxu0 0.0
    %1820 = vmatprep.subr.mxu0 0.0
    %1821 = vmatpush1.msra.mxu0 0.0
    %1822 = vmatprep.subr.mxu0 0.0
    %1823 = vmatpush1.msra.mxu0 0.0
    %1824 = vmatprep.subr.mxu0 0.0
    %1825 = vmatpush1.msra.mxu0 0.0
    %1826 = vmatprep.subr.mxu0 0.0
    %1827 = vmatpush1.msra.mxu0 0.0
    %1828 = vmatprep.subr.mxu0 0.0
    %1829 = vmatpush1.msra.mxu0 0.0
    %1830 = vmatprep.subr.mxu0 0.0
    %1831 = vmatpush1.msra.mxu0 0.0
    %1832 = vmatprep.subr.mxu0 0.0
    %1833 = vmatpush1.msra.mxu0 0.0
    %1834 = vmatprep.subr.mxu0 0.0
    %1835 = vmatpush1.msra.mxu0 0.0
    %1836 = vmatprep.subr.mxu0 0.0
    %1837 = vmatpush1.msra.mxu0 0.0
    %1838 = vmatprep.subr.mxu0 0.0
    %1839 = vmatpush1.msra.mxu0 0.0
    %1840 = vmatprep.subr.mxu0 0.0
    %1841 = vmatpush1.msra.mxu0 0.0
    %1842 = vmatprep.subr.mxu0 0.0
    %1843 = vmatpush1.msra.mxu0 0.0
    %1844 = vmatprep.subr.mxu0 0.0
    %1845 = vmatpush1.msra.mxu0 0.0
    %1846 = vmatprep.subr.mxu0 0.0
    %1847 = vmatpush1.msra.mxu0 0.0
    %1848 = vmatprep.subr.mxu0 0.0
    %1849 = vmatpush1.msra.mxu0 0.0
    %1850 = vmatprep.subr.mxu0 0.0
    %1851 = vmatpush1.msra.mxu0 0.0
    %1852 = vmatprep.subr.mxu0 0.0
    %1853 = vmatpush1.msra.mxu0 0.0
    %1854 = vmatprep.subr.mxu0 0.0
    %1855 = vmatpush1.msra.mxu0 0.0
    %1856 = vmatprep.subr.mxu0 0.0
    %1857 = vmatpush1.msra.mxu0 0.0
    %1858 = vmatprep.subr.mxu0 0.0
    %1859 = vmatpush1.msra.mxu0 0.0
    %1860 = vmatprep.subr.mxu0 0.0
    %1861 = vmatpush1.msra.mxu0 0.0
    %1862 = vmatprep.subr.mxu0 0.0
    %1863 = vmatpush1.msra.mxu0 0.0
    %1864 = vmatprep.mubr.f32.mxu0 0.0
    %1865 = vmatmul.mubr.f32.gmra.mrb[0].mxu0 %v1798
    %v1866 = vpop.f32.mrb[0].mxu0
    %v1867 = vadd.f32 0.0, %v1866
    %v1868 = vpop.f32.mrb[0].mxu0
    %v1869 = vadd.f32 0.0, %v1868
    %1870 = vdwg.mxu0
    %v1873 = vrot.slane %v1867, 6
    %v1874 = vrot.slane %v1869, 6
    %v1877 = vadd.f32 %v1320, %v1873
    %v1878 = vadd.f32 %v1322, %v1874
    %v1879 = vxor.u32 %v1877, 2147483648
    %v1880 = vmul.f32 %v1879, 1.442695
    %v1881 = vpow.pop %v1880
    %v1882 = vadd.f32 %v1881, 1.0
    %v1883 = vrcp.pop %v1882
    %v1884 = vmul.f32 1.0, %v1883
    %v1885 = vtanh.pop %v1878
    %v1886 = vxor.u32 %v1878, 2147483648
    %v1887 = vmul.f32 %v1886, 1.442695
    %v1888 = vpow.pop %v1887
    %v1889 = vadd.f32 %v1888, 1.0
    %v1890 = vrcp.pop %v1889
    %v1891 = vmul.f32 1.0, %v1890
    %v1893 = vrot.slane %v1792, 6
    %v1895 = vmul.f32 %v1884, %v1893
    %v1896 = vmul.f32 %v1884, %v1885
    %1898 = vrot.lane.b32.xlu0 %v1896, 64
    %v1899 = vpop.permute.xlu0 %1898
    %v1901 = vadd.f32 %v1895, %v1899
    %v1902 = vtanh.pop %v1901
    %v1903 = vmul.f32 %v1891, %v1902
    %v1905 = vrot.slane %v1903, 2
    %1906 = vrot.lane.b32.xlu0 %v1905, 64
    %v1907 = vpop.permute.xlu0 %1906
    %v1908 = vsel %vm350, %v1907, 0
    %1910 = vmatprep.subr.mxu0 %v1325
    %1911 = vmatpush1.msra.mxu0 %v1324
    %1912 = vmatprep.subr.mxu0 %v1327
    %1913 = vmatpush1.msra.mxu0 %v1326
    %1914 = vmatprep.subr.mxu0 %v1329
    %1915 = vmatpush1.msra.mxu0 %v1328
    %1916 = vmatprep.subr.mxu0 %v1331
    %1917 = vmatpush1.msra.mxu0 %v1330
    %1918 = vmatprep.subr.mxu0 %v1333
    %1919 = vmatpush1.msra.mxu0 %v1332
    %1920 = vmatprep.subr.mxu0 %v1335
    %1921 = vmatpush1.msra.mxu0 %v1334
    %1922 = vmatprep.subr.mxu0 %v1337
    %1923 = vmatpush1.msra.mxu0 %v1336
    %1924 = vmatprep.subr.mxu0 %v1339
    %1925 = vmatpush1.msra.mxu0 %v1338
    %1926 = vmatprep.subr.mxu0 0.0
    %1927 = vmatpush1.msra.mxu0 0.0
    %1928 = vmatprep.subr.mxu0 0.0
    %1929 = vmatpush1.msra.mxu0 0.0
    %1930 = vmatprep.subr.mxu0 0.0
    %1931 = vmatpush1.msra.mxu0 0.0
    %1932 = vmatprep.subr.mxu0 0.0
    %1933 = vmatpush1.msra.mxu0 0.0
    %1934 = vmatprep.subr.mxu0 0.0
    %1935 = vmatpush1.msra.mxu0 0.0
    %1936 = vmatprep.subr.mxu0 0.0
    %1937 = vmatpush1.msra.mxu0 0.0
    %1938 = vmatprep.subr.mxu0 0.0
    %1939 = vmatpush1.msra.mxu0 0.0
    %1940 = vmatprep.subr.mxu0 0.0
    %1941 = vmatpush1.msra.mxu0 0.0
    %1942 = vmatprep.subr.mxu0 0.0
    %1943 = vmatpush1.msra.mxu0 0.0
    %1944 = vmatprep.subr.mxu0 0.0
    %1945 = vmatpush1.msra.mxu0 0.0
    %1946 = vmatprep.subr.mxu0 0.0
    %1947 = vmatpush1.msra.mxu0 0.0
    %1948 = vmatprep.subr.mxu0 0.0
    %1949 = vmatpush1.msra.mxu0 0.0
    %1950 = vmatprep.subr.mxu0 0.0
    %1951 = vmatpush1.msra.mxu0 0.0
    %1952 = vmatprep.subr.mxu0 0.0
    %1953 = vmatpush1.msra.mxu0 0.0
    %1954 = vmatprep.subr.mxu0 0.0
    %1955 = vmatpush1.msra.mxu0 0.0
    %1956 = vmatprep.subr.mxu0 0.0
    %1957 = vmatpush1.msra.mxu0 0.0
    %1958 = vmatprep.subr.mxu0 0.0
    %1959 = vmatpush1.msra.mxu0 0.0
    %1960 = vmatprep.subr.mxu0 0.0
    %1961 = vmatpush1.msra.mxu0 0.0
    %1962 = vmatprep.subr.mxu0 0.0
    %1963 = vmatpush1.msra.mxu0 0.0
    %1964 = vmatprep.subr.mxu0 0.0
    %1965 = vmatpush1.msra.mxu0 0.0
    %1966 = vmatprep.subr.mxu0 0.0
    %1967 = vmatpush1.msra.mxu0 0.0
    %1968 = vmatprep.subr.mxu0 0.0
    %1969 = vmatpush1.msra.mxu0 0.0
    %1970 = vmatprep.subr.mxu0 0.0
    %1971 = vmatpush1.msra.mxu0 0.0
    %1972 = vmatprep.subr.mxu0 0.0
    %1973 = vmatpush1.msra.mxu0 0.0
    %1974 = vmatprep.mubr.f32.mxu0 0.0
    %1975 = vmatmul.mubr.f32.gmra.mrb[0].mxu0 %v1908
    %v1976 = vpop.f32.mrb[0].mxu0
    %v1977 = vadd.f32 0.0, %v1976
    %v1978 = vpop.f32.mrb[0].mxu0
    %v1979 = vadd.f32 0.0, %v1978
    %1980 = vdwg.mxu0
    %v1983 = vrot.slane %v1977, 4
    %v1984 = vrot.slane %v1979, 4
    %v1987 = vadd.f32 %v1320, %v1983
    %v1988 = vadd.f32 %v1322, %v1984
    %v1989 = vxor.u32 %v1987, 2147483648
    %v1990 = vmul.f32 %v1989, 1.442695
    %v1991 = vpow.pop %v1990
    %v1992 = vadd.f32 %v1991, 1.0
    %v1993 = vrcp.pop %v1992
    %v1994 = vmul.f32 1.0, %v1993
    %v1995 = vtanh.pop %v1988
    %v1996 = vxor.u32 %v1988, 2147483648
    %v1997 = vmul.f32 %v1996, 1.442695
    %v1998 = vpow.pop %v1997
    %v1999 = vadd.f32 %v1998, 1.0
    %v2000 = vrcp.pop %v1999
    %v2001 = vmul.f32 1.0, %v2000
    %v2003 = vrot.slane %v1901, 6
    %v2005 = vmul.f32 %v1994, %v2003
    %v2006 = vmul.f32 %v1994, %v1995
    %2008 = vrot.lane.b32.xlu0 %v2006, 64
    %v2009 = vpop.permute.xlu0 %2008
    %v2011 = vadd.f32 %v2005, %v2009
    %v2012 = vtanh.pop %v2011
    %v2013 = vmul.f32 %v2001, %v2012
    %v2015 = vrot.slane %v2013, 4
    %2016 = vrot.lane.b32.xlu0 %v2015, 64
    %v2017 = vpop.permute.xlu0 %2016
    %v2018 = vsel %vm350, %v2017, 0
    %2020 = vmatprep.subr.mxu0 %v1325
    %2021 = vmatpush1.msra.mxu0 %v1324
    %2022 = vmatprep.subr.mxu0 %v1327
    %2023 = vmatpush1.msra.mxu0 %v1326
    %2024 = vmatprep.subr.mxu0 %v1329
    %2025 = vmatpush1.msra.mxu0 %v1328
    %2026 = vmatprep.subr.mxu0 %v1331
    %2027 = vmatpush1.msra.mxu0 %v1330
    %2028 = vmatprep.subr.mxu0 %v1333
    %2029 = vmatpush1.msra.mxu0 %v1332
    %2030 = vmatprep.subr.mxu0 %v1335
    %2031 = vmatpush1.msra.mxu0 %v1334
    %2032 = vmatprep.subr.mxu0 %v1337
    %2033 = vmatpush1.msra.mxu0 %v1336
    %2034 = vmatprep.subr.mxu0 %v1339
    %2035 = vmatpush1.msra.mxu0 %v1338
    %2036 = vmatprep.subr.mxu0 0.0
    %2037 = vmatpush1.msra.mxu0 0.0
    %2038 = vmatprep.subr.mxu0 0.0
    %2039 = vmatpush1.msra.mxu0 0.0
    %2040 = vmatprep.subr.mxu0 0.0
    %2041 = vmatpush1.msra.mxu0 0.0
    %2042 = vmatprep.subr.mxu0 0.0
    %2043 = vmatpush1.msra.mxu0 0.0
    %2044 = vmatprep.subr.mxu0 0.0
    %2045 = vmatpush1.msra.mxu0 0.0
    %2046 = vmatprep.subr.mxu0 0.0
    %2047 = vmatpush1.msra.mxu0 0.0
    %2048 = vmatprep.subr.mxu0 0.0
    %2049 = vmatpush1.msra.mxu0 0.0
    %2050 = vmatprep.subr.mxu0 0.0
    %2051 = vmatpush1.msra.mxu0 0.0
    %2052 = vmatprep.subr.mxu0 0.0
    %2053 = vmatpush1.msra.mxu0 0.0
    %2054 = vmatprep.subr.mxu0 0.0
    %2055 = vmatpush1.msra.mxu0 0.0
    %2056 = vmatprep.subr.mxu0 0.0
    %2057 = vmatpush1.msra.mxu0 0.0
    %2058 = vmatprep.subr.mxu0 0.0
    %2059 = vmatpush1.msra.mxu0 0.0
    %2060 = vmatprep.subr.mxu0 0.0
    %2061 = vmatpush1.msra.mxu0 0.0
    %2062 = vmatprep.subr.mxu0 0.0
    %2063 = vmatpush1.msra.mxu0 0.0
    %2064 = vmatprep.subr.mxu0 0.0
    %2065 = vmatpush1.msra.mxu0 0.0
    %2066 = vmatprep.subr.mxu0 0.0
    %2067 = vmatpush1.msra.mxu0 0.0
    %2068 = vmatprep.subr.mxu0 0.0
    %2069 = vmatpush1.msra.mxu0 0.0
    %2070 = vmatprep.subr.mxu0 0.0
    %2071 = vmatpush1.msra.mxu0 0.0
    %2072 = vmatprep.subr.mxu0 0.0
    %2073 = vmatpush1.msra.mxu0 0.0
    %2074 = vmatprep.subr.mxu0 0.0
    %2075 = vmatpush1.msra.mxu0 0.0
    %2076 = vmatprep.subr.mxu0 0.0
    %2077 = vmatpush1.msra.mxu0 0.0
    %2078 = vmatprep.subr.mxu0 0.0
    %2079 = vmatpush1.msra.mxu0 0.0
    %2080 = vmatprep.subr.mxu0 0.0
    %2081 = vmatpush1.msra.mxu0 0.0
    %2082 = vmatprep.subr.mxu0 0.0
    %2083 = vmatpush1.msra.mxu0 0.0
    %2084 = vmatprep.mubr.f32.mxu0 0.0
    %2085 = vmatmul.mubr.f32.gmra.mrb[0].mxu0 %v2018
    %v2086 = vpop.f32.mrb[0].mxu0
    %v2087 = vadd.f32 0.0, %v2086
    %v2088 = vpop.f32.mrb[0].mxu0
    %v2089 = vadd.f32 0.0, %v2088
    %2090 = vdwg.mxu0
    %v2093 = vrot.slane %v2087, 2
    %v2094 = vrot.slane %v2089, 2
    %v2097 = vadd.f32 %v1320, %v2093
    %v2098 = vadd.f32 %v1322, %v2094
    %v2099 = vxor.u32 %v2097, 2147483648
    %v2100 = vmul.f32 %v2099, 1.442695
    %v2101 = vpow.pop %v2100
    %v2102 = vadd.f32 %v2101, 1.0
    %v2103 = vrcp.pop %v2102
    %v2104 = vmul.f32 1.0, %v2103
    %v2105 = vtanh.pop %v2098
    %v2106 = vxor.u32 %v2098, 2147483648
    %v2107 = vmul.f32 %v2106, 1.442695
    %v2108 = vpow.pop %v2107
    %v2109 = vadd.f32 %v2108, 1.0
    %v2110 = vrcp.pop %v2109
    %v2111 = vmul.f32 1.0, %v2110
    %v2113 = vrot.slane %v2011, 6
    %v2115 = vmul.f32 %v2104, %v2113
    %v2116 = vmul.f32 %v2104, %v2105
    %2118 = vrot.lane.b32.xlu0 %v2116, 64
    %v2119 = vpop.permute.xlu0 %2118
    %v2121 = vadd.f32 %v2115, %v2119
    %v2122 = vtanh.pop %v2121
    %v2123 = vmul.f32 %v2111, %v2122
    %v2124 = vld [vmem:[%s9] sm:$0xff]
    %v2125 = vld [vmem:[%s9 + $0x8] sm:$0xff]
    %v2126 = vld [vmem:[%s9 + $0x10] sm:$0xff]
    %v2127 = vld [vmem:[%s9 + $0x18] sm:$0xff]
    %v2128 = vld [vmem:[%s9 + $0x20] sm:$0xff]
    %v2129 = vld [vmem:[%s9 + $0x28] sm:$0xff]
    %v2130 = vld [vmem:[%s9 + $0x30] sm:$0xff]
    %v2131 = vld [vmem:[%s9 + $0x38] sm:$0xff]
    %v2132 = vld [vmem:[#allocation2] sm:$0x1]
    %v2134 = vlaneseq
    %v2135 = vshrl.u32 %v2134, 7
    %v2136 = vsub.s32 0, %v2135
    %v2137 = vrot.slane %v2132, %v2136
    %v2140 = vrot.slane %v2123, 6
    %2141 = vrot.lane.b32.xlu0 %v2140, 64
    %v2142 = vpop.permute.xlu0 %2141
    %v2143 = vsel %vm350, %v2142, 0
    %2145 = vmatprep.subr.mxu0 0.0
    %2146 = vmatpush1.msra.mxu0 %v2124
    %2147 = vmatprep.subr.mxu0 0.0
    %2148 = vmatpush1.msra.mxu0 %v2125
    %2149 = vmatprep.subr.mxu0 0.0
    %2150 = vmatpush1.msra.mxu0 %v2126
    %2151 = vmatprep.subr.mxu0 0.0
    %2152 = vmatpush1.msra.mxu0 %v2127
    %2153 = vmatprep.subr.mxu0 0.0
    %2154 = vmatpush1.msra.mxu0 %v2128
    %2155 = vmatprep.subr.mxu0 0.0
    %2156 = vmatpush1.msra.mxu0 %v2129
    %2157 = vmatprep.subr.mxu0 0.0
    %2158 = vmatpush1.msra.mxu0 %v2130
    %2159 = vmatprep.subr.mxu0 0.0
    %2160 = vmatpush1.msra.mxu0 %v2131
    %2161 = vmatprep.subr.mxu0 0.0
    %2162 = vmatpush1.msra.mxu0 0.0
    %2163 = vmatprep.subr.mxu0 0.0
    %2164 = vmatpush1.msra.mxu0 0.0
    %2165 = vmatprep.subr.mxu0 0.0
    %2166 = vmatpush1.msra.mxu0 0.0
    %2167 = vmatprep.subr.mxu0 0.0
    %2168 = vmatpush1.msra.mxu0 0.0
    %2169 = vmatprep.subr.mxu0 0.0
    %2170 = vmatpush1.msra.mxu0 0.0
    %2171 = vmatprep.subr.mxu0 0.0
    %2172 = vmatpush1.msra.mxu0 0.0
    %2173 = vmatprep.subr.mxu0 0.0
    %2174 = vmatpush1.msra.mxu0 0.0
    %2175 = vmatprep.subr.mxu0 0.0
    %2176 = vmatpush1.msra.mxu0 0.0
    %2177 = vmatprep.subr.mxu0 0.0
    %2178 = vmatpush1.msra.mxu0 0.0
    %2179 = vmatprep.subr.mxu0 0.0
    %2180 = vmatpush1.msra.mxu0 0.0
    %2181 = vmatprep.subr.mxu0 0.0
    %2182 = vmatpush1.msra.mxu0 0.0
    %2183 = vmatprep.subr.mxu0 0.0
    %2184 = vmatpush1.msra.mxu0 0.0
    %2185 = vmatprep.subr.mxu0 0.0
    %2186 = vmatpush1.msra.mxu0 0.0
    %2187 = vmatprep.subr.mxu0 0.0
    %2188 = vmatpush1.msra.mxu0 0.0
    %2189 = vmatprep.subr.mxu0 0.0
    %2190 = vmatpush1.msra.mxu0 0.0
    %2191 = vmatprep.subr.mxu0 0.0
    %2192 = vmatpush1.msra.mxu0 0.0
    %2193 = vmatprep.subr.mxu0 0.0
    %2194 = vmatpush1.msra.mxu0 0.0
    %2195 = vmatprep.subr.mxu0 0.0
    %2196 = vmatpush1.msra.mxu0 0.0
    %2197 = vmatprep.subr.mxu0 0.0
    %2198 = vmatpush1.msra.mxu0 0.0
    %2199 = vmatprep.subr.mxu0 0.0
    %2200 = vmatpush1.msra.mxu0 0.0
    %2201 = vmatprep.subr.mxu0 0.0
    %2202 = vmatpush1.msra.mxu0 0.0
    %2203 = vmatprep.subr.mxu0 0.0
    %2204 = vmatpush1.msra.mxu0 0.0
    %2205 = vmatprep.subr.mxu0 0.0
    %2206 = vmatpush1.msra.mxu0 0.0
    %2207 = vmatprep.subr.mxu0 0.0
    %2208 = vmatpush1.msra.mxu0 0.0
    %2209 = vmatprep.mubr.f32.mxu0 0.0
    %2210 = vmatmul.mubr.f32.gmra.mrb[0].mxu0 %v2143
    %v2211 = vpop.f32.mrb[0].mxu0
    %v2212 = vadd.f32 %v2137, %v2211
    %v2213 = vpop.f32.mrb[0].mxu0
    %2214 = vdwg.mxu0
    %v2215 = vxor.u32 %v2212, 2147483648
    %v2216 = vmul.f32 %v2215, 1.442695
    %v2217 = vpow.pop %v2216
    %v2218 = vadd.f32 %v2217, 1.0
    %v2219 = vrcp.pop %v2218
    %v2220 = vmul.f32 1.0, %v2219
    %vm2221 = vcmask 1024
    %2222 = vst.msk [vmem:[%s11] sm:$0x3] %vm2221, %v2220
    // Predicated region
    $region58: #{rnn_model_forward.1} parent=1 // pred_check
      _
    $region59: #{rnn_model_forward.1} parent=1 // pred_check_branch
      %2224 = sbr.rel (0) target = $region61
    $region60: #{rnn_model_forward.1} parent=1 // pred_region
      _
    $region61: #{rnn_model_forward.1} parent=1 // pred_fallthru
      _
    // Predicated region
    $region62: #{rnn_model_forward.1} parent=1 // pred_check
      _
    $region63: #{rnn_model_forward.1} parent=1 // pred_check_branch
      %2226 = sbr.rel (0) target = $region65
    $region64: #{rnn_model_forward.1} parent=1 // pred_region
      _
    $region65: #{rnn_model_forward.1} parent=1 // pred_fallthru
      _
    %2227 = vsyncpa [#allocation4], 1
    %2228 = vsyncpa [#allocation6], 1

</llo_original>
